<compile_context>
chip_gen: v7x
topology: tpu7x:2x2x1
jax: 0.10.0
libtpu: 0.0.40
codegen_flags: <defaults>
</compile_context>

<pallas_src>
import functools
import math

import jax
import jax.numpy as jnp
from jax.experimental import pallas as pl
from jax.experimental.pallas import tpu as pltpu

SIZE = 256    # hidden width fixed by the module ("size = 256")
LANES = 128   # TPU lane width; heads / feature dims padded to a multiple


# ------------------------------ small helpers -------------------------------
def _round_up(x, m):
    return ((x + m - 1) // m) * m


def _hw_config():
    """(tanh_bf16, two_tensorcores, batch_tile_cap) from the device kind."""
    try:
        kind = jax.devices()[0].device_kind.lower()
    except Exception:  # pragma: no cover - defensive
        kind = ""
    is_v7 = ("7x" in kind) or ("v7" in kind)
    is_v6 = "v6" in kind
    tanh_bf16 = is_v6 or is_v7          # bf16 EUP only on v6e / v7x
    tile_cap = 1024 if tanh_bf16 else 512
    return tanh_bf16, is_v7, tile_cap


def _pick_tile_b(batch, two_cores, cap):
    """Batch tile: 512-1024 rows (VMEM-budgeted); on v7x make sure the grid
    has >= 2 steps so both TensorCores work; tiny batches -> multiple of 8."""
    if two_cores and batch >= 16:
        if batch <= 2 * cap:
            return max(8, _round_up(-(-batch // 2), 8))   # exactly 2 steps
        return cap
    if batch >= cap:
        return cap
    return max(8, _round_up(batch, 8))


def _compiler_params(tile_b):
    # Explicit 32 MiB scoped-VMEM limit once the tile is large (v5e's default
    # is only 16 MiB; v6e/v7x defaults already sit at 32 MiB).
    vmem = (32 * 1024 * 1024) if tile_b >= 512 else None
    return pltpu.CompilerParams(dimension_semantics=("parallel",),
                                vmem_limit_bytes=vmem)


def _pad2(x, rows, cols, dtype):
    pr, pc = rows - x.shape[0], cols - x.shape[1]
    if pr or pc:
        x = jnp.pad(x, ((0, pr), (0, pc)))
    return x.astype(dtype)


def _batch_spec(tile_b, cols):
    return pl.BlockSpec((tile_b, cols), lambda i: (i, 0))


def _resident_spec(shape):
    # Constant block index -> fetched once, VMEM-resident across grid steps;
    # single-buffered since it is never refilled.
    return pl.BlockSpec(shape, lambda i: (0, 0), pipeline_mode=pl.Buffered(1))


def _cast_weights_bf16(params):
    """fp32 master params; weights (even indices) cast to bf16 at call time,
    biases (odd indices) stay fp32."""
    return tuple(p.astype(jnp.bfloat16) if i % 2 == 0 else p
                 for i, p in enumerate(params))


def _mlp_cost(bp, state_in, obs_in, actor_out, critic_out):
    def mlp_flops(d_in, d_out):
        return 2 * bp * (d_in * SIZE + SIZE * 2 * SIZE
                         + 2 * SIZE * SIZE + SIZE * d_out)
    flops = mlp_flops(state_in, actor_out) + mlp_flops(obs_in, critic_out)
    # tanh: 2 MLPs x (256 + 512 + 256) per row; exp: actor_out lanes per row.
    transcendentals = bp * (2 * 4 * SIZE + actor_out)
    return flops, transcendentals


# ------------------------------ Pallas kernels -------------------------------
def _mlp4(x_bf16, w1, b1, w2, b2, w3, b3, w4, b4, *, tanh_bf16):
    """(Linear Tanh) x3 -> Linear.  bf16 matmuls, fp32 accumulation.
    tanh runs in bf16 on v6e/v7x (EUP), fp32 on v5e."""
    def act(z):
        if tanh_bf16:
            return jnp.tanh(z.astype(jnp.bfloat16))
        return jnp.tanh(z).astype(jnp.bfloat16)
    h = act(jnp.dot(x_bf16, w1[...],
                    preferred_element_type=jnp.float32) + b1[...])
    h = act(jnp.dot(h, w2[...],
                    preferred_element_type=jnp.float32) + b2[...])
    h = act(jnp.dot(h, w3[...],
                    preferred_element_type=jnp.float32) + b3[...])
    return jnp.dot(h, w4[...],
                   preferred_element_type=jnp.float32) + b4[...]


def _evaluate_discrete_kernel(state_ref, obs_ref, act_ref,
                              aw1, ab1, aw2, ab2, aw3, ab3, aw4, ab4,
                              cw1, cb1, cw2, cb2, cw3, cb3, cw4, cb4,
                              out_ref, *, action_dim, tanh_bf16):
    """Fused discrete evaluate(): actor logits -> log-softmax log_prob of the
    taken action + entropy (no probs materialized) + critic value, packed in a
    lane-dense [TILE_B, 128] slab: lane0=logprob, lane1=value, lane2=entropy."""
    # ---- actor -------------------------------------------------------------
    logits = _mlp4(state_ref[...], aw1, ab1, aw2, ab2, aw3, ab3, aw4, ab4,
                   tanh_bf16=tanh_bf16)
    lane = jax.lax.broadcasted_iota(jnp.int32, logits.shape, 1)
    valid = lane < action_dim
    logits = jnp.where(valid, logits, jnp.float32(-1e30))   # mask padded lanes

    m = jnp.max(logits, axis=-1, keepdims=True)
    shifted = logits - m
    e = jnp.where(valid, jnp.exp(shifted), 0.0)
    s = jnp.sum(e, axis=-1, keepdims=True)                   # >= 1, no log(0)
    log_s = jnp.log(s)
    log_z = m + log_s                                        # log-sum-exp

    # Entropy without probs:  H = log_s - (1/s) * sum_i e_i*(logits_i - m).
    weighted = jnp.sum(jnp.where(valid, e * shifted, 0.0),
                       axis=-1, keepdims=True)
    entropy = log_s - weighted / s                           # exact reciprocal

    act = act_ref[...]                                       # [TILE_B, 1] i32
    logit_a = jnp.sum(jnp.where(lane == act, logits, 0.0),
                      axis=-1, keepdims=True)
    logp_a = logit_a - log_z

    # ---- critic ------------------------------------------------------------
    vhead = _mlp4(obs_ref[...], cw1, cb1, cw2, cb2, cw3, cb3, cw4, cb4,
                  tanh_bf16=tanh_bf16)
    value = vhead[:, 0:1]

    # ---- lane-dense packed output -------------------------------------------
    out_lane = jax.lax.broadcasted_iota(jnp.int32, out_ref.shape, 1)
    out_ref[...] = jnp.where(out_lane == 0, logp_a,
                   jnp.where(out_lane == 1, value,
                   jnp.where(out_lane == 2, entropy, 0.0)))


def _forward_continuous_kernel(state_ref, obs_ref,
                               aw1, ab1, aw2, ab2, aw3, ab3, aw4, ab4,
                               cw1, cb1, cw2, cb2, cw3, cb3, cw4, cb4,
                               mean_ref, val_ref, *, tanh_bf16):
    """Fused continuous forward: actor action-mean (padded head) + critic
    value head.  Diagonal-covariance MVN log_prob/entropy stay in JAX glue."""
    mean_ref[...] = _mlp4(state_ref[...],
                          aw1, ab1, aw2, ab2, aw3, ab3, aw4, ab4,
                          tanh_bf16=tanh_bf16)
    val_ref[...] = _mlp4(obs_ref[...],
                         cw1, cb1, cw2, cb2, cw3, cb3, cw4, cb4,
                         tanh_bf16=tanh_bf16)


# ------------------------------- wrappers ------------------------------------
def _fused_evaluate_discrete(state, observations, action,
                             actor_params, critic_params, action_dim):
    tanh_bf16, two_cores, cap = _hw_config()
    B = state.shape[0]
    TB = _pick_tile_b(B, two_cores, cap)
    Bp = _round_up(B, TB)

    actor_params = _cast_weights_bf16(actor_params)
    critic_params = _cast_weights_bf16(critic_params)
    state_in = actor_params[0].shape[0]      # 128-padded layer-1 in-dim
    obs_in = critic_params[0].shape[0]

    state_p = _pad2(jnp.asarray(state, jnp.float32), Bp, state_in,
                    jnp.bfloat16)
    obs_p = _pad2(jnp.asarray(observations, jnp.float32), Bp, obs_in,
                  jnp.bfloat16)
    act_p = _pad2(jnp.asarray(action, jnp.int32).reshape(-1, 1), Bp, 1,
                  jnp.int32)

    weights = actor_params + critic_params
    args = (state_p, obs_p, act_p) + weights

    in_specs = [_batch_spec(TB, state_in),
                _batch_spec(TB, obs_in),
                _batch_spec(TB, 1)]
    in_specs += [_resident_spec(w.shape) for w in weights]

    actor_head = actor_params[6].shape[1]
    critic_head = critic_params[6].shape[1]
    flops, transc = _mlp_cost(Bp, state_in, obs_in, actor_head, critic_head)
    bytes_accessed = (sum(int(a.size) * a.dtype.itemsize for a in args)
                      + Bp * LANES * 4)

    packed = pl.pallas_call(
        functools.partial(_evaluate_discrete_kernel, action_dim=action_dim,
                          tanh_bf16=tanh_bf16),
        grid=(Bp // TB,),
        in_specs=in_specs,
        out_specs=_batch_spec(TB, LANES),
        out_shape=jax.ShapeDtypeStruct((Bp, LANES), jnp.float32),
        compiler_params=_compiler_params(TB),
        cost_estimate=pl.CostEstimate(flops=flops, transcendentals=transc,
                                      bytes_accessed=bytes_accessed),
    )(*args)

    packed = packed[:B]
    return packed[:, 0], packed[:, 1:2], packed[:, 2]


def _fused_forward_continuous(state, observations, actor_params,
                              critic_params):
    tanh_bf16, two_cores, cap = _hw_config()
    B = state.shape[0]
    TB = _pick_tile_b(B, two_cores, cap)
    Bp = _round_up(B, TB)

    actor_params = _cast_weights_bf16(actor_params)
    critic_params = _cast_weights_bf16(critic_params)
    state_in = actor_params[0].shape[0]
    obs_in = critic_params[0].shape[0]

    state_p = _pad2(jnp.asarray(state, jnp.float32), Bp, state_in,
                    jnp.bfloat16)
    obs_p = _pad2(jnp.asarray(observations, jnp.float32), Bp, obs_in,
                  jnp.bfloat16)

    weights = actor_params + critic_params
    args = (state_p, obs_p) + weights

    in_specs = [_batch_spec(TB, state_in), _batch_spec(TB, obs_in)]
    in_specs += [_resident_spec(w.shape) for w in weights]

    actor_head = actor_params[6].shape[1]
    critic_head = critic_params[6].shape[1]
    flops, transc = _mlp_cost(Bp, state_in, obs_in, actor_head, critic_head)
    bytes_accessed = (sum(int(a.size) * a.dtype.itemsize for a in args)
                      + Bp * (actor_head + critic_head) * 4)

    mean_pad, val_pad = pl.pallas_call(
        functools.partial(_forward_continuous_kernel, tanh_bf16=tanh_bf16),
        grid=(Bp // TB,),
        in_specs=in_specs,
        out_specs=(_batch_spec(TB, actor_head), _batch_spec(TB, critic_head)),
        out_shape=(jax.ShapeDtypeStruct((Bp, actor_head), jnp.float32),
                   jax.ShapeDtypeStruct((Bp, critic_head), jnp.float32)),
        compiler_params=_compiler_params(TB),
        cost_estimate=pl.CostEstimate(flops=flops, transcendentals=transc,
                                      bytes_accessed=bytes_accessed),
    )(*args)
    return mean_pad[:B], val_pad[:B, 0:1]


# ------------------------- Parameter construction ---------------------------
def _linear_params(key, in_dim, out_dim, in_pad=None, out_pad=None):
    """PyTorch-style nn.Linear init (uniform +/- 1/sqrt(fan_in)).
    fp32 MASTER weights stored transposed [in, out] (zero-padded to lane-dense
    in/out dims); bias fp32 [1, out].  bf16 cast happens at kernel-call time."""
    kw, kb = jax.random.split(key)
    bound = 1.0 / math.sqrt(in_dim)
    w = jax.random.uniform(kw, (in_dim, out_dim), jnp.float32, -bound, bound)
    b = jax.random.uniform(kb, (1, out_dim), jnp.float32, -bound, bound)
    if in_pad is not None and in_pad > in_dim:
        w = jnp.pad(w, ((0, in_pad - in_dim), (0, 0)))
    if out_pad is not None and out_pad > out_dim:
        w = jnp.pad(w, ((0, 0), (0, out_pad - out_dim)))
        b = jnp.pad(b, ((0, 0), (0, out_pad - out_dim)))
    return w, b


def make_actor_critic_params(key, nagents, state_dim, action_dim):
    actor_head = _round_up(max(action_dim, 1), LANES)
    critic_head = LANES
    state_pad = _round_up(state_dim, LANES)
    obs_pad = _round_up(state_dim * nagents, LANES)
    keys = jax.random.split(key, 8)
    # actor: state_dim -> 256 -> 512 -> 256 -> action_dim (lane-padded)
    a1 = _linear_params(keys[0], state_dim, SIZE, in_pad=state_pad)
    a2 = _linear_params(keys[1], SIZE, 2 * SIZE)
    a3 = _linear_params(keys[2], 2 * SIZE, SIZE)
    a4 = _linear_params(keys[3], SIZE, action_dim, out_pad=actor_head)
    # critic: state_dim*nagents -> 256 -> 512 -> 256 -> 1 (lane-padded)
    c1 = _linear_params(keys[4], state_dim * nagents, SIZE, in_pad=obs_pad)
    c2 = _linear_params(keys[5], SIZE, 2 * SIZE)
    c3 = _linear_params(keys[6], 2 * SIZE, SIZE)
    c4 = _linear_params(keys[7], SIZE, 1, out_pad=critic_head)
    return a1 + a2 + a3 + a4, c1 + c2 + c3 + c4


# ----------------------------- Module forward -------------------------------
def actor_critic_evaluate(observations, state, action, actor_params,
                          critic_params, action_dim,
                          has_continuous_action_space=False,
                          action_std_init=0.6):
    """Mirrors ActorCritic.evaluate()."""
    if not has_continuous_action_space:
        # Discrete branch: log-prob, entropy and value all inside one kernel.
        return _fused_evaluate_discrete(state, observations, action,
                                        actor_params, critic_params,
                                        action_dim)

    # Continuous branch: kernel produces action mean + value; diagonal-cov
    # MultivariateNormal log_prob / entropy are tiny glue ops here.
    mean_pad, state_values = _fused_forward_continuous(
        state, observations, actor_params, critic_params)
    action_mean = mean_pad[:, :action_dim]
    action = jnp.asarray(action, jnp.float32)
    if action_dim == 1:
        action = action.reshape(-1, action_dim)
    var = jnp.full((action_dim,), action_std_init * action_std_init,
                   jnp.float32)
    log2pi = math.log(2.0 * math.pi)
    diff = action - action_mean
    action_logprobs = -0.5 * (jnp.sum(diff * diff / var, axis=-1)
                              + jnp.sum(jnp.log(var)) + action_dim * log2pi)
    ent = 0.5 * (action_dim * (1.0 + log2pi) + jnp.sum(jnp.log(var)))
    dist_entropy = jnp.broadcast_to(ent, (action_mean.shape[0],))
    return action_logprobs, state_values, dist_entropy


# --------------------------------- Demo --------------------------------------
if __name__ == "__main__":
    key = jax.random.PRNGKey(0)
    k_params, k_state, k_obs, k_act = jax.random.split(key, 4)

    batch = 8
    nagents = 2
    state_dim = 16
    action_dim = 6

    # ------------------------- discrete branch ------------------------------
    actor_params, critic_params = make_actor_critic_params(
        k_params, nagents, state_dim, action_dim)

    state = jax.random.normal(k_state, (batch, state_dim), jnp.float32)
    observations = jax.random.normal(
        k_obs, (batch, state_dim * nagents), jnp.float32)
    action = jax.random.randint(k_act, (batch,), 0, action_dim)

    action_logprobs, state_values, dist_entropy = actor_critic_evaluate(
        observations, state, action, actor_params, critic_params,
        action_dim=action_dim, has_continuous_action_space=False)
    jax.block_until_ready((action_logprobs, state_values, dist_entropy))

    assert action_logprobs.shape == (batch,)
    assert state_values.shape == (batch, 1)
    assert dist_entropy.shape == (batch,)
    assert bool(jnp.all(jnp.isfinite(action_logprobs)))
    assert bool(jnp.all(jnp.isfinite(state_values)))
    assert bool(jnp.all(dist_entropy > 0.0))
    assert bool(jnp.all(action_logprobs < 0.0))

    # ------------------------ continuous branch -----------------------------
    c_action_dim = 4
    c_actor_params, c_critic_params = make_actor_critic_params(
        k_params, nagents, state_dim, c_action_dim)
    c_action = jax.random.normal(k_act, (batch, c_action_dim), jnp.float32)

    c_logprobs, c_values, c_entropy = actor_critic_evaluate(
        observations, state, c_action, c_actor_params, c_critic_params,
        action_dim=c_action_dim, has_continuous_action_space=True,
        action_std_init=0.6)
    jax.block_until_ready((c_logprobs, c_values, c_entropy))

    assert c_logprobs.shape == (batch,)
    assert c_values.shape == (batch, 1)
    assert c_entropy.shape == (batch,)
    assert bool(jnp.all(jnp.isfinite(c_logprobs)))
    assert bool(jnp.all(jnp.isfinite(c_values)))

    print("KERNEL_OK")
</pallas_src>

<mosaic_0001>
module attributes {stable_mosaic.version = 11 : i64} {
  func.func @_evaluate_discrete_kernel(%arg0: i32, %arg1: memref<8x128xbf16, #tpu.memory_space<vmem>>, %arg2: memref<8x128xbf16, #tpu.memory_space<vmem>>, %arg3: memref<8x1xi32, #tpu.memory_space<vmem>>, %arg4: memref<128x256xbf16, #tpu.memory_space<vmem>>, %arg5: memref<1x256xf32, #tpu.memory_space<vmem>>, %arg6: memref<256x512xbf16, #tpu.memory_space<vmem>>, %arg7: memref<1x512xf32, #tpu.memory_space<vmem>>, %arg8: memref<512x256xbf16, #tpu.memory_space<vmem>>, %arg9: memref<1x256xf32, #tpu.memory_space<vmem>>, %arg10: memref<256x128xbf16, #tpu.memory_space<vmem>>, %arg11: memref<1x128xf32, #tpu.memory_space<vmem>>, %arg12: memref<128x256xbf16, #tpu.memory_space<vmem>>, %arg13: memref<1x256xf32, #tpu.memory_space<vmem>>, %arg14: memref<256x512xbf16, #tpu.memory_space<vmem>>, %arg15: memref<1x512xf32, #tpu.memory_space<vmem>>, %arg16: memref<512x256xbf16, #tpu.memory_space<vmem>>, %arg17: memref<1x256xf32, #tpu.memory_space<vmem>>, %arg18: memref<256x128xbf16, #tpu.memory_space<vmem>>, %arg19: memref<1x128xf32, #tpu.memory_space<vmem>>, %arg20: memref<8x128xf32, #tpu.memory_space<vmem>>) attributes {dimension_semantics = [#tpu.dimension_semantics<parallel>], iteration_bounds = array<i64: 1>, scalar_prefetch = 0 : i64, scratch_operands = 0 : i64, tpu.core_type = #tpu.core_type<tc>, window_params = [{transform_indices = @transform_0, window_bounds = array<i64: 8, 128>}, {transform_indices = @transform_1, window_bounds = array<i64: 8, 128>}, {transform_indices = @transform_2, window_bounds = array<i64: 8, 1>}, {pipeline_mode = #tpu.pipeline_mode<synchronous>, transform_indices = @transform_3, window_bounds = array<i64: 128, 256>}, {pipeline_mode = #tpu.pipeline_mode<synchronous>, transform_indices = @transform_4, window_bounds = array<i64: 1, 256>}, {pipeline_mode = #tpu.pipeline_mode<synchronous>, transform_indices = @transform_5, window_bounds = array<i64: 256, 512>}, {pipeline_mode = #tpu.pipeline_mode<synchronous>, transform_indices = @transform_6, window_bounds = array<i64: 1, 512>}, {pipeline_mode = #tpu.pipeline_mode<synchronous>, transform_indices = @transform_7, window_bounds = array<i64: 512, 256>}, {pipeline_mode = #tpu.pipeline_mode<synchronous>, transform_indices = @transform_8, window_bounds = array<i64: 1, 256>}, {pipeline_mode = #tpu.pipeline_mode<synchronous>, transform_indices = @transform_9, window_bounds = array<i64: 256, 128>}, {pipeline_mode = #tpu.pipeline_mode<synchronous>, transform_indices = @transform_10, window_bounds = array<i64: 1, 128>}, {pipeline_mode = #tpu.pipeline_mode<synchronous>, transform_indices = @transform_11, window_bounds = array<i64: 128, 256>}, {pipeline_mode = #tpu.pipeline_mode<synchronous>, transform_indices = @transform_12, window_bounds = array<i64: 1, 256>}, {pipeline_mode = #tpu.pipeline_mode<synchronous>, transform_indices = @transform_13, window_bounds = array<i64: 256, 512>}, {pipeline_mode = #tpu.pipeline_mode<synchronous>, transform_indices = @transform_14, window_bounds = array<i64: 1, 512>}, {pipeline_mode = #tpu.pipeline_mode<synchronous>, transform_indices = @transform_15, window_bounds = array<i64: 512, 256>}, {pipeline_mode = #tpu.pipeline_mode<synchronous>, transform_indices = @transform_16, window_bounds = array<i64: 1, 256>}, {pipeline_mode = #tpu.pipeline_mode<synchronous>, transform_indices = @transform_17, window_bounds = array<i64: 256, 128>}, {pipeline_mode = #tpu.pipeline_mode<synchronous>, transform_indices = @transform_18, window_bounds = array<i64: 1, 128>}, {transform_indices = @transform_19, window_bounds = array<i64: 8, 128>}]} {
    %c0 = arith.constant 0 : index
    %c0_0 = arith.constant 0 : index
    %0 = vector.load %arg1[%c0, %c0_0] : memref<8x128xbf16, #tpu.memory_space<vmem>>, vector<8x128xbf16>
    %c0_1 = arith.constant 0 : index
    %c0_2 = arith.constant 0 : index
    %1 = vector.load %arg4[%c0_1, %c0_2] : memref<128x256xbf16, #tpu.memory_space<vmem>>, vector<128x256xbf16>
    %cst = arith.constant dense<0.000000e+00> : vector<8x256xf32>
    %2 = tpu.matmul %0, %1, %cst {dimension_numbers = #tpu.dot_dimension_numbers<[1], [0], [0], [1], [0, 0, 1, 1], [], []>} : vector<8x128xbf16>, vector<128x256xbf16>, vector<8x256xf32> -> vector<8x256xf32>
    %c0_3 = arith.constant 0 : index
    %c0_4 = arith.constant 0 : index
    %3 = vector.load %arg5[%c0_3, %c0_4] : memref<1x256xf32, #tpu.memory_space<vmem>>, vector<1x256xf32>
    %4 = vector.broadcast %3 : vector<1x256xf32> to vector<8x256xf32>
    %5 = arith.addf %2, %4 : vector<8x256xf32>
    %6 = math.tanh %5 : vector<8x256xf32>
    %7 = arith.truncf %6 : vector<8x256xf32> to vector<8x256xbf16>
    %c0_5 = arith.constant 0 : index
    %c0_6 = arith.constant 0 : index
    %8 = vector.load %arg6[%c0_5, %c0_6] : memref<256x512xbf16, #tpu.memory_space<vmem>>, vector<256x512xbf16>
    %cst_7 = arith.constant dense<0.000000e+00> : vector<8x512xf32>
    %9 = tpu.matmul %7, %8, %cst_7 {dimension_numbers = #tpu.dot_dimension_numbers<[1], [0], [0], [1], [0, 0, 1, 1], [], []>} : vector<8x256xbf16>, vector<256x512xbf16>, vector<8x512xf32> -> vector<8x512xf32>
    %c0_8 = arith.constant 0 : index
    %c0_9 = arith.constant 0 : index
    %10 = vector.load %arg7[%c0_8, %c0_9] : memref<1x512xf32, #tpu.memory_space<vmem>>, vector<1x512xf32>
    %11 = vector.broadcast %10 : vector<1x512xf32> to vector<8x512xf32>
    %12 = arith.addf %9, %11 : vector<8x512xf32>
    %13 = math.tanh %12 : vector<8x512xf32>
    %14 = arith.truncf %13 : vector<8x512xf32> to vector<8x512xbf16>
    %c0_10 = arith.constant 0 : index
    %c0_11 = arith.constant 0 : index
    %15 = vector.load %arg8[%c0_10, %c0_11] : memref<512x256xbf16, #tpu.memory_space<vmem>>, vector<512x256xbf16>
    %cst_12 = arith.constant dense<0.000000e+00> : vector<8x256xf32>
    %16 = tpu.matmul %14, %15, %cst_12 {dimension_numbers = #tpu.dot_dimension_numbers<[1], [0], [0], [1], [0, 0, 1, 1], [], []>} : vector<8x512xbf16>, vector<512x256xbf16>, vector<8x256xf32> -> vector<8x256xf32>
    %c0_13 = arith.constant 0 : index
    %c0_14 = arith.constant 0 : index
    %17 = vector.load %arg9[%c0_13, %c0_14] : memref<1x256xf32, #tpu.memory_space<vmem>>, vector<1x256xf32>
    %18 = vector.broadcast %17 : vector<1x256xf32> to vector<8x256xf32>
    %19 = arith.addf %16, %18 : vector<8x256xf32>
    %20 = math.tanh %19 : vector<8x256xf32>
    %21 = arith.truncf %20 : vector<8x256xf32> to vector<8x256xbf16>
    %c0_15 = arith.constant 0 : index
    %c0_16 = arith.constant 0 : index
    %22 = vector.load %arg10[%c0_15, %c0_16] : memref<256x128xbf16, #tpu.memory_space<vmem>>, vector<256x128xbf16>
    %cst_17 = arith.constant dense<0.000000e+00> : vector<8x128xf32>
    %23 = tpu.matmul %21, %22, %cst_17 {dimension_numbers = #tpu.dot_dimension_numbers<[1], [0], [0], [1], [0, 0, 1, 1], [], []>} : vector<8x256xbf16>, vector<256x128xbf16>, vector<8x128xf32> -> vector<8x128xf32>
    %c0_18 = arith.constant 0 : index
    %c0_19 = arith.constant 0 : index
    %24 = vector.load %arg11[%c0_18, %c0_19] : memref<1x128xf32, #tpu.memory_space<vmem>>, vector<1x128xf32>
    %25 = vector.broadcast %24 : vector<1x128xf32> to vector<8x128xf32>
    %26 = arith.addf %23, %25 : vector<8x128xf32>
    %27 = tpu.iota {dimensions = array<i32: 1>} : vector<8x128xi32>
    %c6_i32 = arith.constant 6 : i32
    %28 = vector.broadcast %c6_i32 : i32 to vector<8x128xi32>
    %29 = arith.cmpi slt, %27, %28 : vector<8x128xi32>
    %cst_20 = arith.constant -1.000000e+30 : f32
    %30 = vector.broadcast %cst_20 : f32 to vector<8x128xf32>
    %31 = arith.select %29, %26, %30 : vector<8x128xi1>, vector<8x128xf32>
    %cst_21 = arith.constant dense<0xFF800000> : vector<8xf32>
    %32 = vector.multi_reduction <maximumf>, %31, %cst_21 [1] : vector<8x128xf32> to vector<8xf32>
    %33 = vector.shape_cast %32 : vector<8xf32> to vector<8x1xf32>
    %34 = vector.broadcast %33 : vector<8x1xf32> to vector<8x128xf32>
    %35 = arith.subf %31, %34 : vector<8x128xf32>
    %36 = math.exp %35 : vector<8x128xf32>
    %cst_22 = arith.constant 0.000000e+00 : f32
    %37 = vector.broadcast %cst_22 : f32 to vector<8x128xf32>
    %38 = arith.select %29, %36, %37 : vector<8x128xi1>, vector<8x128xf32>
    %cst_23 = arith.constant dense<0.000000e+00> : vector<8xf32>
    %39 = vector.multi_reduction <add>, %38, %cst_23 [1] : vector<8x128xf32> to vector<8xf32>
    %40 = vector.shape_cast %39 : vector<8xf32> to vector<8x1xf32>
    %41 = math.log %40 : vector<8x1xf32>
    %42 = arith.addf %33, %41 : vector<8x1xf32>
    %43 = arith.mulf %38, %35 : vector<8x128xf32>
    %cst_24 = arith.constant 0.000000e+00 : f32
    %44 = vector.broadcast %cst_24 : f32 to vector<8x128xf32>
    %45 = arith.select %29, %43, %44 : vector<8x128xi1>, vector<8x128xf32>
    %cst_25 = arith.constant dense<0.000000e+00> : vector<8xf32>
    %46 = vector.multi_reduction <add>, %45, %cst_25 [1] : vector<8x128xf32> to vector<8xf32>
    %47 = vector.shape_cast %46 : vector<8xf32> to vector<8x1xf32>
    %48 = arith.divf %47, %40 : vector<8x1xf32>
    %49 = arith.subf %41, %48 : vector<8x1xf32>
    %c0_26 = arith.constant 0 : index
    %c0_27 = arith.constant 0 : index
    %50 = vector.load %arg3[%c0_26, %c0_27] : memref<8x1xi32, #tpu.memory_space<vmem>>, vector<8x1xi32>
    %51 = vector.broadcast %50 : vector<8x1xi32> to vector<8x128xi32>
    %52 = arith.cmpi eq, %27, %51 : vector<8x128xi32>
    %cst_28 = arith.constant 0.000000e+00 : f32
    %53 = vector.broadcast %cst_28 : f32 to vector<8x128xf32>
    %54 = arith.select %52, %31, %53 : vector<8x128xi1>, vector<8x128xf32>
    %cst_29 = arith.constant dense<0.000000e+00> : vector<8xf32>
    %55 = vector.multi_reduction <add>, %54, %cst_29 [1] : vector<8x128xf32> to vector<8xf32>
    %56 = vector.shape_cast %55 : vector<8xf32> to vector<8x1xf32>
    %57 = arith.subf %56, %42 : vector<8x1xf32>
    %c0_30 = arith.constant 0 : index
    %c0_31 = arith.constant 0 : index
    %58 = vector.load %arg2[%c0_30, %c0_31] : memref<8x128xbf16, #tpu.memory_space<vmem>>, vector<8x128xbf16>
    %c0_32 = arith.constant 0 : index
    %c0_33 = arith.constant 0 : index
    %59 = vector.load %arg12[%c0_32, %c0_33] : memref<128x256xbf16, #tpu.memory_space<vmem>>, vector<128x256xbf16>
    %cst_34 = arith.constant dense<0.000000e+00> : vector<8x256xf32>
    %60 = tpu.matmul %58, %59, %cst_34 {dimension_numbers = #tpu.dot_dimension_numbers<[1], [0], [0], [1], [0, 0, 1, 1], [], []>} : vector<8x128xbf16>, vector<128x256xbf16>, vector<8x256xf32> -> vector<8x256xf32>
    %c0_35 = arith.constant 0 : index
    %c0_36 = arith.constant 0 : index
    %61 = vector.load %arg13[%c0_35, %c0_36] : memref<1x256xf32, #tpu.memory_space<vmem>>, vector<1x256xf32>
    %62 = vector.broadcast %61 : vector<1x256xf32> to vector<8x256xf32>
    %63 = arith.addf %60, %62 : vector<8x256xf32>
    %64 = math.tanh %63 : vector<8x256xf32>
    %65 = arith.truncf %64 : vector<8x256xf32> to vector<8x256xbf16>
    %c0_37 = arith.constant 0 : index
    %c0_38 = arith.constant 0 : index
    %66 = vector.load %arg14[%c0_37, %c0_38] : memref<256x512xbf16, #tpu.memory_space<vmem>>, vector<256x512xbf16>
    %cst_39 = arith.constant dense<0.000000e+00> : vector<8x512xf32>
    %67 = tpu.matmul %65, %66, %cst_39 {dimension_numbers = #tpu.dot_dimension_numbers<[1], [0], [0], [1], [0, 0, 1, 1], [], []>} : vector<8x256xbf16>, vector<256x512xbf16>, vector<8x512xf32> -> vector<8x512xf32>
    %c0_40 = arith.constant 0 : index
    %c0_41 = arith.constant 0 : index
    %68 = vector.load %arg15[%c0_40, %c0_41] : memref<1x512xf32, #tpu.memory_space<vmem>>, vector<1x512xf32>
    %69 = vector.broadcast %68 : vector<1x512xf32> to vector<8x512xf32>
    %70 = arith.addf %67, %69 : vector<8x512xf32>
    %71 = math.tanh %70 : vector<8x512xf32>
    %72 = arith.truncf %71 : vector<8x512xf32> to vector<8x512xbf16>
    %c0_42 = arith.constant 0 : index
    %c0_43 = arith.constant 0 : index
    %73 = vector.load %arg16[%c0_42, %c0_43] : memref<512x256xbf16, #tpu.memory_space<vmem>>, vector<512x256xbf16>
    %cst_44 = arith.constant dense<0.000000e+00> : vector<8x256xf32>
    %74 = tpu.matmul %72, %73, %cst_44 {dimension_numbers = #tpu.dot_dimension_numbers<[1], [0], [0], [1], [0, 0, 1, 1], [], []>} : vector<8x512xbf16>, vector<512x256xbf16>, vector<8x256xf32> -> vector<8x256xf32>
    %c0_45 = arith.constant 0 : index
    %c0_46 = arith.constant 0 : index
    %75 = vector.load %arg17[%c0_45, %c0_46] : memref<1x256xf32, #tpu.memory_space<vmem>>, vector<1x256xf32>
    %76 = vector.broadcast %75 : vector<1x256xf32> to vector<8x256xf32>
    %77 = arith.addf %74, %76 : vector<8x256xf32>
    %78 = math.tanh %77 : vector<8x256xf32>
    %79 = arith.truncf %78 : vector<8x256xf32> to vector<8x256xbf16>
    %c0_47 = arith.constant 0 : index
    %c0_48 = arith.constant 0 : index
    %80 = vector.load %arg18[%c0_47, %c0_48] : memref<256x128xbf16, #tpu.memory_space<vmem>>, vector<256x128xbf16>
    %cst_49 = arith.constant dense<0.000000e+00> : vector<8x128xf32>
    %81 = tpu.matmul %79, %80, %cst_49 {dimension_numbers = #tpu.dot_dimension_numbers<[1], [0], [0], [1], [0, 0, 1, 1], [], []>} : vector<8x256xbf16>, vector<256x128xbf16>, vector<8x128xf32> -> vector<8x128xf32>
    %c0_50 = arith.constant 0 : index
    %c0_51 = arith.constant 0 : index
    %82 = vector.load %arg19[%c0_50, %c0_51] : memref<1x128xf32, #tpu.memory_space<vmem>>, vector<1x128xf32>
    %83 = vector.broadcast %82 : vector<1x128xf32> to vector<8x128xf32>
    %84 = arith.addf %81, %83 : vector<8x128xf32>
    %85 = vector.extract_strided_slice %84 {offsets = [0, 0], sizes = [8, 1], strides = [1, 1]} : vector<8x128xf32> to vector<8x1xf32>
    %86 = tpu.iota {dimensions = array<i32: 1>} : vector<8x128xi32>
    %c0_i32 = arith.constant 0 : i32
    %87 = vector.broadcast %c0_i32 : i32 to vector<8x128xi32>
    %88 = arith.cmpi eq, %86, %87 : vector<8x128xi32>
    %c1_i32 = arith.constant 1 : i32
    %89 = vector.broadcast %c1_i32 : i32 to vector<8x128xi32>
    %90 = arith.cmpi eq, %86, %89 : vector<8x128xi32>
    %c2_i32 = arith.constant 2 : i32
    %91 = vector.broadcast %c2_i32 : i32 to vector<8x128xi32>
    %92 = arith.cmpi eq, %86, %91 : vector<8x128xi32>
    %cst_52 = arith.constant 0.000000e+00 : f32
    %93 = vector.shape_cast %49 : vector<8x1xf32> to vector<8x1xf32>
    %94 = vector.broadcast %93 : vector<8x1xf32> to vector<8x128xf32>
    %95 = vector.broadcast %cst_52 : f32 to vector<8x128xf32>
    %96 = arith.select %92, %94, %95 : vector<8x128xi1>, vector<8x128xf32>
    %97 = vector.shape_cast %85 : vector<8x1xf32> to vector<8x1xf32>
    %98 = vector.broadcast %97 : vector<8x1xf32> to vector<8x128xf32>
    %99 = arith.select %90, %98, %96 : vector<8x128xi1>, vector<8x128xf32>
    %100 = vector.shape_cast %57 : vector<8x1xf32> to vector<8x1xf32>
    %101 = vector.broadcast %100 : vector<8x1xf32> to vector<8x128xf32>
    %102 = arith.select %88, %101, %99 : vector<8x128xi1>, vector<8x128xf32>
    %c0_53 = arith.constant 0 : index
    %c0_54 = arith.constant 0 : index
    %103 = vector.load %arg20[%c0_53, %c0_54] : memref<8x128xf32, #tpu.memory_space<vmem>>, vector<8x128xf32>
    tpu.vector_store %arg20[%c0_53, %c0_54], %102 {strides = array<i32>} : memref<8x128xf32, #tpu.memory_space<vmem>>, vector<8x128xf32>,
    return
  }
  func.func @transform_0(%arg0: i32) -> (i32, i32) {
    %c0_i32 = arith.constant 0 : i32
    %c0_i32_0 = arith.constant 0 : i32
    return %arg0, %c0_i32 : i32, i32
  }
  func.func @transform_1(%arg0: i32) -> (i32, i32) {
    %c0_i32 = arith.constant 0 : i32
    %c0_i32_0 = arith.constant 0 : i32
    return %arg0, %c0_i32 : i32, i32
  }
  func.func @transform_2(%arg0: i32) -> (i32, i32) {
    %c0_i32 = arith.constant 0 : i32
    %c0_i32_0 = arith.constant 0 : i32
    return %arg0, %c0_i32 : i32, i32
  }
  func.func @transform_3(%arg0: i32) -> (i32, i32) {
    %c0_i32 = arith.constant 0 : i32
    %c0_i32_0 = arith.constant 0 : i32
    %c0_i32_1 = arith.constant 0 : i32
    return %c0_i32, %c0_i32_0 : i32, i32
  }
  func.func @transform_4(%arg0: i32) -> (i32, i32) {
    %c0_i32 = arith.constant 0 : i32
    %c0_i32_0 = arith.constant 0 : i32
    %c0_i32_1 = arith.constant 0 : i32
    return %c0_i32, %c0_i32_0 : i32, i32
  }
  func.func @transform_5(%arg0: i32) -> (i32, i32) {
    %c0_i32 = arith.constant 0 : i32
    %c0_i32_0 = arith.constant 0 : i32
    %c0_i32_1 = arith.constant 0 : i32
    return %c0_i32, %c0_i32_0 : i32, i32
  }
  func.func @transform_6(%arg0: i32) -> (i32, i32) {
    %c0_i32 = arith.constant 0 : i32
    %c0_i32_0 = arith.constant 0 : i32
    %c0_i32_1 = arith.constant 0 : i32
    return %c0_i32, %c0_i32_0 : i32, i32
  }
  func.func @transform_7(%arg0: i32) -> (i32, i32) {
    %c0_i32 = arith.constant 0 : i32
    %c0_i32_0 = arith.constant 0 : i32
    %c0_i32_1 = arith.constant 0 : i32
    return %c0_i32, %c0_i32_0 : i32, i32
  }
  func.func @transform_8(%arg0: i32) -> (i32, i32) {
    %c0_i32 = arith.constant 0 : i32
    %c0_i32_0 = arith.constant 0 : i32
    %c0_i32_1 = arith.constant 0 : i32
    return %c0_i32, %c0_i32_0 : i32, i32
  }
  func.func @transform_9(%arg0: i32) -> (i32, i32) {
    %c0_i32 = arith.constant 0 : i32
    %c0_i32_0 = arith.constant 0 : i32
    %c0_i32_1 = arith.constant 0 : i32
    return %c0_i32, %c0_i32_0 : i32, i32
  }
  func.func @transform_10(%arg0: i32) -> (i32, i32) {
    %c0_i32 = arith.constant 0 : i32
    %c0_i32_0 = arith.constant 0 : i32
    %c0_i32_1 = arith.constant 0 : i32
    return %c0_i32, %c0_i32_0 : i32, i32
  }
  func.func @transform_11(%arg0: i32) -> (i32, i32) {
    %c0_i32 = arith.constant 0 : i32
    %c0_i32_0 = arith.constant 0 : i32
    %c0_i32_1 = arith.constant 0 : i32
    return %c0_i32, %c0_i32_0 : i32, i32
  }
  func.func @transform_12(%arg0: i32) -> (i32, i32) {
    %c0_i32 = arith.constant 0 : i32
    %c0_i32_0 = arith.constant 0 : i32
    %c0_i32_1 = arith.constant 0 : i32
    return %c0_i32, %c0_i32_0 : i32, i32
  }
  func.func @transform_13(%arg0: i32) -> (i32, i32) {
    %c0_i32 = arith.constant 0 : i32
    %c0_i32_0 = arith.constant 0 : i32
    %c0_i32_1 = arith.constant 0 : i32
    return %c0_i32, %c0_i32_0 : i32, i32
  }
  func.func @transform_14(%arg0: i32) -> (i32, i32) {
    %c0_i32 = arith.constant 0 : i32
    %c0_i32_0 = arith.constant 0 : i32
    %c0_i32_1 = arith.constant 0 : i32
    return %c0_i32, %c0_i32_0 : i32, i32
  }
  func.func @transform_15(%arg0: i32) -> (i32, i32) {
    %c0_i32 = arith.constant 0 : i32
    %c0_i32_0 = arith.constant 0 : i32
    %c0_i32_1 = arith.constant 0 : i32
    return %c0_i32, %c0_i32_0 : i32, i32
  }
  func.func @transform_16(%arg0: i32) -> (i32, i32) {
    %c0_i32 = arith.constant 0 : i32
    %c0_i32_0 = arith.constant 0 : i32
    %c0_i32_1 = arith.constant 0 : i32
    return %c0_i32, %c0_i32_0 : i32, i32
  }
  func.func @transform_17(%arg0: i32) -> (i32, i32) {
    %c0_i32 = arith.constant 0 : i32
    %c0_i32_0 = arith.constant 0 : i32
    %c0_i32_1 = arith.constant 0 : i32
    return %c0_i32, %c0_i32_0 : i32, i32
  }
  func.func @transform_18(%arg0: i32) -> (i32, i32) {
    %c0_i32 = arith.constant 0 : i32
    %c0_i32_0 = arith.constant 0 : i32
    %c0_i32_1 = arith.constant 0 : i32
    return %c0_i32, %c0_i32_0 : i32, i32
  }
  func.func @transform_19(%arg0: i32) -> (i32, i32) {
    %c0_i32 = arith.constant 0 : i32
    %c0_i32_0 = arith.constant 0 : i32
    return %arg0, %c0_i32 : i32, i32
  }
}

</mosaic_0001>

<llo_original>
// kernel: tpu_custom_call.1
$region0: #{tpu_custom_call.1}
  #allocation0 [shape = 'u32[]', space=smem, size = 0x4, offset = 0x4, fixed_abs, tag = 'smem constant byte address 0x4 - core index']
  #allocation1 [shape = 'u32[144,128]{1,0:T(1,128)}', space=vmem, size = 0x12000, scoped, tag = 'internal scratch']
  %s0 = inlined_call_operand.vmem [shape: bf16[8,128], index: 0, kind: input, shape index: {}]
  %s1 = inlined_call_operand.vmem [shape: bf16[8,128], index: 1, kind: input, shape index: {}]
  %s2 = inlined_call_operand.vmem [shape: s32[8,1], index: 2, kind: input, shape index: {}]
  %s3 = inlined_call_operand.hbm [shape: bf16[128,256], index: 3, kind: input, shape index: {}]
  %s4 = inlined_call_operand.vmem [shape: f32[1,256], index: 4, kind: input, shape index: {}]
  %s5 = inlined_call_operand.hbm [shape: bf16[256,512], index: 5, kind: input, shape index: {}]
  %s6 = inlined_call_operand.vmem [shape: f32[1,512], index: 6, kind: input, shape index: {}]
  %s7 = inlined_call_operand.hbm [shape: bf16[512,256], index: 7, kind: input, shape index: {}]
  %s8 = inlined_call_operand.vmem [shape: f32[1,256], index: 8, kind: input, shape index: {}]
  %s9 = inlined_call_operand.hbm [shape: bf16[256,128], index: 9, kind: input, shape index: {}]
  %s10 = inlined_call_operand.vmem [shape: f32[1,128], index: 10, kind: input, shape index: {}]
  %s11 = inlined_call_operand.hbm [shape: bf16[128,256], index: 11, kind: input, shape index: {}]
  %s12 = inlined_call_operand.vmem [shape: f32[1,256], index: 12, kind: input, shape index: {}]
  %s13 = inlined_call_operand.hbm [shape: bf16[256,512], index: 13, kind: input, shape index: {}]
  %s14 = inlined_call_operand.vmem [shape: f32[1,512], index: 14, kind: input, shape index: {}]
  %s15 = inlined_call_operand.hbm [shape: bf16[512,256], index: 15, kind: input, shape index: {}]
  %s16 = inlined_call_operand.vmem [shape: f32[1,256], index: 16, kind: input, shape index: {}]
  %s17 = inlined_call_operand.hbm [shape: bf16[256,128], index: 17, kind: input, shape index: {}]
  %s18 = inlined_call_operand.vmem [shape: f32[1,128], index: 18, kind: input, shape index: {}]
  %s19 = inlined_call_operand.hbm [shape: f32[8,128], index: 19, kind: output, shape index: {}]
  %s20 = sld [smem:[#allocation0]]
  $region118: #{tpu_custom_call.1} parent=0
    _
  %s22 = ssub.s32 1, %s20
  %s23 = scalar_select 0, %s22, %s20
  $region1: #{tpu_custom_call.1} parent=0
    #allocation2 [shape = 'u8[65536]{0}', space=vmem, size = 0x10000, scoped, tag = 'input window, operand 3, single buffered']
    #allocation3 [shape = 's32[1]{0}', space=sflag, size = 0x4, scoped, tag = 'scoped memory for tpu_custom_call.1']
    #allocation4 [shape = 's32[1]{0}', space=sflag, size = 0x4, scoped, tag = 'scoped memory for tpu_custom_call.1']
    #allocation5 [shape = 'u8[262144]{0}', space=vmem, size = 0x40000, scoped, tag = 'input window, operand 5, single buffered']
    #allocation6 [shape = 's32[1]{0}', space=sflag, size = 0x4, scoped, tag = 'scoped memory for tpu_custom_call.1']
    #allocation7 [shape = 'u8[262144]{0}', space=vmem, size = 0x40000, scoped, tag = 'input window, operand 7, single buffered']
    #allocation8 [shape = 'u8[65536]{0}', space=vmem, size = 0x10000, scoped, tag = 'input window, operand 9, single buffered']
    #allocation9 [shape = 's32[1]{0}', space=sflag, size = 0x4, scoped, tag = 'scoped memory for tpu_custom_call.1']
    #allocation10 [shape = 'u8[65536]{0}', space=vmem, size = 0x10000, scoped, tag = 'input window, operand 11, single buffered']
    #allocation11 [shape = 'u8[262144]{0}', space=vmem, size = 0x40000, scoped, tag = 'input window, operand 13, single buffered']
    #allocation12 [shape = 's32[1]{0}', space=sflag, size = 0x4, scoped, tag = 'scoped memory for tpu_custom_call.1']
    #allocation13 [shape = 'u8[262144]{0}', space=vmem, size = 0x40000, scoped, tag = 'input window, operand 15, single buffered']
    #allocation14 [shape = 'u8[65536]{0}', space=vmem, size = 0x10000, scoped, tag = 'input window, operand 17, single buffered']
    #allocation15 [shape = 's32[1]{0}', space=sflag, size = 0x4, scoped, tag = 'scoped memory for tpu_custom_call.1']
    #allocation16 [shape = 'u8[4096]{0}', space=vmem, size = 0x1000, scoped, tag = 'output window, operand 0, single buffered']
    %24 = vsyncpa [#allocation3], 0
    %25 = vsyncpa [#allocation6], 0
    %26 = vsyncpa [#allocation9], 0
    %27 = vsyncpa [#allocation12], 0
    %28 = vsyncpa [#allocation15], 0
    %29 = vsyncpa [#allocation4], 0
    // Predicated region
    $region2: #{tpu_custom_call.1} parent=1 // pred_check
      _
    $region3: #{tpu_custom_call.1} parent=1 // pred_check_branch
      %31 = sbr.rel (0) target = $region5
    $region4: #{tpu_custom_call.1} parent=1 // pred_region
      _
    $region5: #{tpu_custom_call.1} parent=1 // pred_fallthru
      _
    // Predicated region
    $region6: #{tpu_custom_call.1} parent=1 // pred_check
      _
    $region7: #{tpu_custom_call.1} parent=1 // pred_check_branch
      %33 = sbr.rel (0) target = $region9
    $region8: #{tpu_custom_call.1} parent=1 // pred_region
      _
    $region9: #{tpu_custom_call.1} parent=1 // pred_fallthru
      _
    // Predicated region
    $region10: #{tpu_custom_call.1} parent=1 // pred_check
      _
    $region11: #{tpu_custom_call.1} parent=1 // pred_check_branch
      %35 = sbr.rel (0) target = $region13
    $region12: #{tpu_custom_call.1} parent=1 // pred_region
      _
    $region13: #{tpu_custom_call.1} parent=1 // pred_fallthru
      _
    // Predicated region
    $region14: #{tpu_custom_call.1} parent=1 // pred_check
      _
    $region15: #{tpu_custom_call.1} parent=1 // pred_check_branch
      %37 = sbr.rel (0) target = $region17
    $region16: #{tpu_custom_call.1} parent=1 // pred_region
      %s39 = ssub.s32 2048, 2048
      %40 = vsyncadd [#allocation3], %s39
      %s41 = sshll.u32 [#allocation2], 4
      %s42 = int_to_ptr.vmem [resolvable:$true] %s41
      %47 = dma.hbm_to_vmem [thread:$0]  %s3, 2048, %s42, [#allocation3], 128, 128, 8
    $region17: #{tpu_custom_call.1} parent=1 // pred_fallthru
      _
    // Predicated region
    $region18: #{tpu_custom_call.1} parent=1 // pred_check
      _
    $region19: #{tpu_custom_call.1} parent=1 // pred_check_branch
      %49 = sbr.rel (0) target = $region21
    $region20: #{tpu_custom_call.1} parent=1 // pred_region
      _
    $region21: #{tpu_custom_call.1} parent=1 // pred_fallthru
      _
    // Predicated region
    $region22: #{tpu_custom_call.1} parent=1 // pred_check
      _
    $region23: #{tpu_custom_call.1} parent=1 // pred_check_branch
      %51 = sbr.rel (0) target = $region25
    $region24: #{tpu_custom_call.1} parent=1 // pred_region
      %s53 = ssub.s32 8192, 8192
      %54 = vsyncadd [#allocation6], %s53
      %s55 = sshll.u32 [#allocation5], 4
      %s56 = int_to_ptr.vmem [resolvable:$true] %s55
      %61 = dma.hbm_to_vmem [thread:$0]  %s5, 8192, %s56, [#allocation6], 256, 256, 16
    $region25: #{tpu_custom_call.1} parent=1 // pred_fallthru
      _
    // Predicated region
    $region26: #{tpu_custom_call.1} parent=1 // pred_check
      _
    $region27: #{tpu_custom_call.1} parent=1 // pred_check_branch
      %63 = sbr.rel (0) target = $region29
    $region28: #{tpu_custom_call.1} parent=1 // pred_region
      _
    $region29: #{tpu_custom_call.1} parent=1 // pred_fallthru
      _
    // Predicated region
    $region30: #{tpu_custom_call.1} parent=1 // pred_check
      _
    $region31: #{tpu_custom_call.1} parent=1 // pred_check_branch
      %65 = sbr.rel (0) target = $region33
    $region32: #{tpu_custom_call.1} parent=1 // pred_region
      %s67 = ssub.s32 8192, 8192
      %68 = vsyncadd [#allocation6], %s67
      %s69 = sshll.u32 [#allocation7], 4
      %s70 = int_to_ptr.vmem [resolvable:$true] %s69
      %75 = dma.hbm_to_vmem [thread:$0]  %s7, 8192, %s70, [#allocation6], 128, 128, 8
    $region33: #{tpu_custom_call.1} parent=1 // pred_fallthru
      _
    // Predicated region
    $region34: #{tpu_custom_call.1} parent=1 // pred_check
      _
    $region35: #{tpu_custom_call.1} parent=1 // pred_check_branch
      %77 = sbr.rel (0) target = $region37
    $region36: #{tpu_custom_call.1} parent=1 // pred_region
      _
    $region37: #{tpu_custom_call.1} parent=1 // pred_fallthru
      _
    // Predicated region
    $region38: #{tpu_custom_call.1} parent=1 // pred_check
      _
    $region39: #{tpu_custom_call.1} parent=1 // pred_check_branch
      %79 = sbr.rel (0) target = $region41
    $region40: #{tpu_custom_call.1} parent=1 // pred_region
      %s81 = ssub.s32 2048, 2048
      %82 = vsyncadd [#allocation9], %s81
      %s83 = sshll.u32 [#allocation8], 4
      %s84 = int_to_ptr.vmem [resolvable:$true] %s83
      %89 = dma.hbm_to_vmem [thread:$0]  %s9, 2048, %s84, [#allocation9], 64, 64, 4
    $region41: #{tpu_custom_call.1} parent=1 // pred_fallthru
      _
    // Predicated region
    $region42: #{tpu_custom_call.1} parent=1 // pred_check
      _
    $region43: #{tpu_custom_call.1} parent=1 // pred_check_branch
      %91 = sbr.rel (0) target = $region45
    $region44: #{tpu_custom_call.1} parent=1 // pred_region
      _
    $region45: #{tpu_custom_call.1} parent=1 // pred_fallthru
      _
    // Predicated region
    $region46: #{tpu_custom_call.1} parent=1 // pred_check
      _
    $region47: #{tpu_custom_call.1} parent=1 // pred_check_branch
      %93 = sbr.rel (0) target = $region49
    $region48: #{tpu_custom_call.1} parent=1 // pred_region
      %s95 = ssub.s32 2048, 2048
      %96 = vsyncadd [#allocation9], %s95
      %s97 = sshll.u32 [#allocation10], 4
      %s98 = int_to_ptr.vmem [resolvable:$true] %s97
      %103 = dma.hbm_to_vmem [thread:$0]  %s11, 2048, %s98, [#allocation9], 128, 128, 8
    $region49: #{tpu_custom_call.1} parent=1 // pred_fallthru
      _
    // Predicated region
    $region50: #{tpu_custom_call.1} parent=1 // pred_check
      _
    $region51: #{tpu_custom_call.1} parent=1 // pred_check_branch
      %105 = sbr.rel (0) target = $region53
    $region52: #{tpu_custom_call.1} parent=1 // pred_region
      _
    $region53: #{tpu_custom_call.1} parent=1 // pred_fallthru
      _
    // Predicated region
    $region54: #{tpu_custom_call.1} parent=1 // pred_check
      _
    $region55: #{tpu_custom_call.1} parent=1 // pred_check_branch
      %107 = sbr.rel (0) target = $region57
    $region56: #{tpu_custom_call.1} parent=1 // pred_region
      %s109 = ssub.s32 8192, 8192
      %110 = vsyncadd [#allocation12], %s109
      %s111 = sshll.u32 [#allocation11], 4
      %s112 = int_to_ptr.vmem [resolvable:$true] %s111
      %117 = dma.hbm_to_vmem [thread:$0]  %s13, 8192, %s112, [#allocation12], 256, 256, 16
    $region57: #{tpu_custom_call.1} parent=1 // pred_fallthru
      _
    // Predicated region
    $region58: #{tpu_custom_call.1} parent=1 // pred_check
      _
    $region59: #{tpu_custom_call.1} parent=1 // pred_check_branch
      %119 = sbr.rel (0) target = $region61
    $region60: #{tpu_custom_call.1} parent=1 // pred_region
      _
    $region61: #{tpu_custom_call.1} parent=1 // pred_fallthru
      _
    // Predicated region
    $region62: #{tpu_custom_call.1} parent=1 // pred_check
      _
    $region63: #{tpu_custom_call.1} parent=1 // pred_check_branch
      %121 = sbr.rel (0) target = $region65
    $region64: #{tpu_custom_call.1} parent=1 // pred_region
      %s123 = ssub.s32 8192, 8192
      %124 = vsyncadd [#allocation12], %s123
      %s125 = sshll.u32 [#allocation13], 4
      %s126 = int_to_ptr.vmem [resolvable:$true] %s125
      %131 = dma.hbm_to_vmem [thread:$0]  %s15, 8192, %s126, [#allocation12], 128, 128, 8
    $region65: #{tpu_custom_call.1} parent=1 // pred_fallthru
      _
    // Predicated region
    $region66: #{tpu_custom_call.1} parent=1 // pred_check
      _
    $region67: #{tpu_custom_call.1} parent=1 // pred_check_branch
      %133 = sbr.rel (0) target = $region69
    $region68: #{tpu_custom_call.1} parent=1 // pred_region
      _
    $region69: #{tpu_custom_call.1} parent=1 // pred_fallthru
      _
    // Predicated region
    $region70: #{tpu_custom_call.1} parent=1 // pred_check
      _
    $region71: #{tpu_custom_call.1} parent=1 // pred_check_branch
      %135 = sbr.rel (0) target = $region73
    $region72: #{tpu_custom_call.1} parent=1 // pred_region
      %s137 = ssub.s32 2048, 2048
      %138 = vsyncadd [#allocation15], %s137
      %s139 = sshll.u32 [#allocation14], 4
      %s140 = int_to_ptr.vmem [resolvable:$true] %s139
      %145 = dma.hbm_to_vmem [thread:$0]  %s17, 2048, %s140, [#allocation15], 64, 64, 4
    $region73: #{tpu_custom_call.1} parent=1 // pred_fallthru
      _
    // Predicated region
    $region74: #{tpu_custom_call.1} parent=1 // pred_check
      _
    $region75: #{tpu_custom_call.1} parent=1 // pred_check_branch
      %147 = sbr.rel (0) target = $region77
    $region76: #{tpu_custom_call.1} parent=1 // pred_region
      _
    $region77: #{tpu_custom_call.1} parent=1 // pred_fallthru
      _
    // Predicated region
    $region78: #{tpu_custom_call.1} parent=1 // pred_check
      _
    $region79: #{tpu_custom_call.1} parent=1 // pred_check_branch
      %149 = sbr.rel (0) target = $region81
    $region80: #{tpu_custom_call.1} parent=1 // pred_region
      %150 = dma.done [#allocation3], 2048
    $region81: #{tpu_custom_call.1} parent=1 // pred_fallthru
      _
    // Predicated region
    $region82: #{tpu_custom_call.1} parent=1 // pred_check
      _
    $region83: #{tpu_custom_call.1} parent=1 // pred_check_branch
      %152 = sbr.rel (0) target = $region85
    $region84: #{tpu_custom_call.1} parent=1 // pred_region
      %153 = dma.done [#allocation6], 8192
    $region85: #{tpu_custom_call.1} parent=1 // pred_fallthru
      _
    // Predicated region
    $region86: #{tpu_custom_call.1} parent=1 // pred_check
      _
    $region87: #{tpu_custom_call.1} parent=1 // pred_check_branch
      %155 = sbr.rel (0) target = $region89
    $region88: #{tpu_custom_call.1} parent=1 // pred_region
      %156 = dma.done [#allocation6], 8192
    $region89: #{tpu_custom_call.1} parent=1 // pred_fallthru
      _
    // Predicated region
    $region90: #{tpu_custom_call.1} parent=1 // pred_check
      _
    $region91: #{tpu_custom_call.1} parent=1 // pred_check_branch
      %158 = sbr.rel (0) target = $region93
    $region92: #{tpu_custom_call.1} parent=1 // pred_region
      %159 = dma.done [#allocation9], 2048
    $region93: #{tpu_custom_call.1} parent=1 // pred_fallthru
      _
    // Predicated region
    $region94: #{tpu_custom_call.1} parent=1 // pred_check
      _
    $region95: #{tpu_custom_call.1} parent=1 // pred_check_branch
      %161 = sbr.rel (0) target = $region97
    $region96: #{tpu_custom_call.1} parent=1 // pred_region
      %162 = dma.done [#allocation9], 2048
    $region97: #{tpu_custom_call.1} parent=1 // pred_fallthru
      _
    // Predicated region
    $region98: #{tpu_custom_call.1} parent=1 // pred_check
      _
    $region99: #{tpu_custom_call.1} parent=1 // pred_check_branch
      %164 = sbr.rel (0) target = $region101
    $region100: #{tpu_custom_call.1} parent=1 // pred_region
      %165 = dma.done [#allocation12], 8192
    $region101: #{tpu_custom_call.1} parent=1 // pred_fallthru
      _
    // Predicated region
    $region102: #{tpu_custom_call.1} parent=1 // pred_check
      _
    $region103: #{tpu_custom_call.1} parent=1 // pred_check_branch
      %167 = sbr.rel (0) target = $region105
    $region104: #{tpu_custom_call.1} parent=1 // pred_region
      %168 = dma.done [#allocation12], 8192
    $region105: #{tpu_custom_call.1} parent=1 // pred_fallthru
      _
    // Predicated region
    $region106: #{tpu_custom_call.1} parent=1 // pred_check
      _
    $region107: #{tpu_custom_call.1} parent=1 // pred_check_branch
      %170 = sbr.rel (0) target = $region109
    $region108: #{tpu_custom_call.1} parent=1 // pred_region
      %171 = dma.done [#allocation15], 2048
    $region109: #{tpu_custom_call.1} parent=1 // pred_fallthru
      _
    %v173 = vld [vmem:[%s0] sm:$0xf]
    %v174 = vld [vmem:[#allocation2] sm:$0xff]
    %v175 = vld [vmem:[#allocation2 + $0x8] sm:$0xff]
    %v176 = vld [vmem:[#allocation2 + $0x10] sm:$0xff]
    %v177 = vld [vmem:[#allocation2 + $0x18] sm:$0xff]
    %v178 = vld [vmem:[#allocation2 + $0x20] sm:$0xff]
    %v179 = vld [vmem:[#allocation2 + $0x28] sm:$0xff]
    %v180 = vld [vmem:[#allocation2 + $0x30] sm:$0xff]
    %v181 = vld [vmem:[#allocation2 + $0x38] sm:$0xff]
    %v182 = vld [vmem:[#allocation2 + $0x40] sm:$0xff]
    %v183 = vld [vmem:[#allocation2 + $0x48] sm:$0xff]
    %v184 = vld [vmem:[#allocation2 + $0x50] sm:$0xff]
    %v185 = vld [vmem:[#allocation2 + $0x58] sm:$0xff]
    %v186 = vld [vmem:[#allocation2 + $0x60] sm:$0xff]
    %v187 = vld [vmem:[#allocation2 + $0x68] sm:$0xff]
    %v188 = vld [vmem:[#allocation2 + $0x70] sm:$0xff]
    %v189 = vld [vmem:[#allocation2 + $0x78] sm:$0xff]
    %v190 = vld [vmem:[%s4] sm:$0x3]
    %v192 = vlaneseq
    %v193 = vshrl.u32 %v192, 7
    %v194 = vsub.s32 0, %v193
    %v195 = vrot.slane %v190, %v194
    %v196 = vlaneseq
    %v197 = vshrl.u32 %v196, 7
    %v198 = vsub.s32 1, %v197
    %v199 = vrot.slane %v190, %v198
    %v218 = vunpack.c.l.b16 %v174
    %v219 = vunpack.c.h.b16 %v174
    %v220 = vunpack.c.l.b16 %v175
    %v221 = vunpack.c.h.b16 %v175
    %v222 = vunpack.c.l.b16 %v176
    %v223 = vunpack.c.h.b16 %v176
    %v224 = vunpack.c.l.b16 %v177
    %v225 = vunpack.c.h.b16 %v177
    %v226 = vunpack.c.l.b16 %v178
    %v227 = vunpack.c.h.b16 %v178
    %v228 = vunpack.c.l.b16 %v179
    %v229 = vunpack.c.h.b16 %v179
    %v230 = vunpack.c.l.b16 %v180
    %v231 = vunpack.c.h.b16 %v180
    %v232 = vunpack.c.l.b16 %v181
    %v233 = vunpack.c.h.b16 %v181
    %v234 = vunpack.c.l.b16 %v182
    %v235 = vunpack.c.h.b16 %v182
    %v236 = vunpack.c.l.b16 %v183
    %v237 = vunpack.c.h.b16 %v183
    %v238 = vunpack.c.l.b16 %v184
    %v239 = vunpack.c.h.b16 %v184
    %v240 = vunpack.c.l.b16 %v185
    %v241 = vunpack.c.h.b16 %v185
    %v242 = vunpack.c.l.b16 %v186
    %v243 = vunpack.c.h.b16 %v186
    %v244 = vunpack.c.l.b16 %v187
    %v245 = vunpack.c.h.b16 %v187
    %v246 = vunpack.c.l.b16 %v188
    %v247 = vunpack.c.h.b16 %v188
    %v248 = vunpack.c.l.b16 %v189
    %v249 = vunpack.c.h.b16 %v189
    %v250 = vpack.c.b16 %v220, %v218
    %v251 = vpack.c.b16 %v221, %v219
    %v252 = vpack.c.b16 %v224, %v222
    %v253 = vpack.c.b16 %v225, %v223
    %v254 = vpack.c.b16 %v228, %v226
    %v255 = vpack.c.b16 %v229, %v227
    %v256 = vpack.c.b16 %v232, %v230
    %v257 = vpack.c.b16 %v233, %v231
    %v258 = vpack.c.b16 %v236, %v234
    %v259 = vpack.c.b16 %v237, %v235
    %v260 = vpack.c.b16 %v240, %v238
    %v261 = vpack.c.b16 %v241, %v239
    %v262 = vpack.c.b16 %v244, %v242
    %v263 = vpack.c.b16 %v245, %v243
    %v264 = vpack.c.b16 %v248, %v246
    %v265 = vpack.c.b16 %v249, %v247
    %282 = vmatprep.subr.bf16.mxu0 %v251
    %283 = vmatpush1.bf16.msra.mxu0 %v250
    %284 = vmatprep.subr.bf16.mxu0 %v253
    %285 = vmatpush1.bf16.msra.mxu0 %v252
    %286 = vmatprep.subr.bf16.mxu0 %v255
    %287 = vmatpush1.bf16.msra.mxu0 %v254
    %288 = vmatprep.subr.bf16.mxu0 %v257
    %289 = vmatpush1.bf16.msra.mxu0 %v256
    %290 = vmatprep.subr.bf16.mxu0 %v259
    %291 = vmatpush1.bf16.msra.mxu0 %v258
    %292 = vmatprep.subr.bf16.mxu0 %v261
    %293 = vmatpush1.bf16.msra.mxu0 %v260
    %294 = vmatprep.subr.bf16.mxu0 %v263
    %295 = vmatpush1.bf16.msra.mxu0 %v262
    %296 = vmatprep.subr.bf16.mxu0 %v265
    %297 = vmatpush1.bf16.msra.mxu0 %v264
    %298 = vmatprep.subr.bf16.mxu0 0
    %299 = vmatpush1.bf16.msra.mxu0 0
    %300 = vmatprep.subr.bf16.mxu0 0
    %301 = vmatpush1.bf16.msra.mxu0 0
    %302 = vmatprep.subr.bf16.mxu0 0
    %303 = vmatpush1.bf16.msra.mxu0 0
    %304 = vmatprep.subr.bf16.mxu0 0
    %305 = vmatpush1.bf16.msra.mxu0 0
    %306 = vmatprep.subr.bf16.mxu0 0
    %307 = vmatpush1.bf16.msra.mxu0 0
    %308 = vmatprep.subr.bf16.mxu0 0
    %309 = vmatpush1.bf16.msra.mxu0 0
    %310 = vmatprep.subr.bf16.mxu0 0
    %311 = vmatpush1.bf16.msra.mxu0 0
    %312 = vmatprep.subr.bf16.mxu0 0
    %313 = vmatpush1.bf16.msra.mxu0 0
    %314 = vmatprep.mubr.bf16.mxu0 0
    %315 = vmatmul.mubr.bf16.gmra.mrb[0].mxu0 %v173
    %v316 = vpop.f32.mrb[0].mxu0
    %v317 = vadd.f32 %v195, %v316
    %v318 = vpop.f32.mrb[0].mxu0
    %v319 = vadd.f32 %v199, %v318
    %v320 = vpop.f32.mrb[0].mxu0
    %v321 = vpop.f32.mrb[0].mxu0
    %322 = vdwg.mxu0
    %v323 = vtanh.pop %v317
    %v324 = vtanh.pop %v319
    %v325 = vpack.c.bf16 %v323, %v323
    %v326 = vpack.c.bf16 %v324, %v324
    %v327 = vld [vmem:[#allocation5] sm:$0xff]
    %v328 = vld [vmem:[#allocation5 + $0x8] sm:$0xff]
    %v329 = vld [vmem:[#allocation5 + $0x10] sm:$0xff]
    %v330 = vld [vmem:[#allocation5 + $0x18] sm:$0xff]
    %v331 = vld [vmem:[#allocation5 + $0x20] sm:$0xff]
    %v332 = vld [vmem:[#allocation5 + $0x28] sm:$0xff]
    %v333 = vld [vmem:[#allocation5 + $0x30] sm:$0xff]
    %v334 = vld [vmem:[#allocation5 + $0x38] sm:$0xff]
    %v335 = vld [vmem:[#allocation5 + $0x40] sm:$0xff]
    %v336 = vld [vmem:[#allocation5 + $0x48] sm:$0xff]
    %v337 = vld [vmem:[#allocation5 + $0x50] sm:$0xff]
    %v338 = vld [vmem:[#allocation5 + $0x58] sm:$0xff]
    %v339 = vld [vmem:[#allocation5 + $0x60] sm:$0xff]
    %v340 = vld [vmem:[#allocation5 + $0x68] sm:$0xff]
    %v341 = vld [vmem:[#allocation5 + $0x70] sm:$0xff]
    %v342 = vld [vmem:[#allocation5 + $0x78] sm:$0xff]
    %v343 = vld [vmem:[#allocation5 + $0x80] sm:$0xff]
    %v344 = vld [vmem:[#allocation5 + $0x88] sm:$0xff]
    %v345 = vld [vmem:[#allocation5 + $0x90] sm:$0xff]
    %v346 = vld [vmem:[#allocation5 + $0x98] sm:$0xff]
    %v347 = vld [vmem:[#allocation5 + $0xa0] sm:$0xff]
    %v348 = vld [vmem:[#allocation5 + $0xa8] sm:$0xff]
    %v349 = vld [vmem:[#allocation5 + $0xb0] sm:$0xff]
    %v350 = vld [vmem:[#allocation5 + $0xb8] sm:$0xff]
    %v351 = vld [vmem:[#allocation5 + $0xc0] sm:$0xff]
    %v352 = vld [vmem:[#allocation5 + $0xc8] sm:$0xff]
    %v353 = vld [vmem:[#allocation5 + $0xd0] sm:$0xff]
    %v354 = vld [vmem:[#allocation5 + $0xd8] sm:$0xff]
    %v355 = vld [vmem:[#allocation5 + $0xe0] sm:$0xff]
    %v356 = vld [vmem:[#allocation5 + $0xe8] sm:$0xff]
    %v357 = vld [vmem:[#allocation5 + $0xf0] sm:$0xff]
    %v358 = vld [vmem:[#allocation5 + $0xf8] sm:$0xff]
    %v359 = vld [vmem:[#allocation5 + $0x100] sm:$0xff]
    %v360 = vld [vmem:[#allocation5 + $0x108] sm:$0xff]
    %v361 = vld [vmem:[#allocation5 + $0x110] sm:$0xff]
    %v362 = vld [vmem:[#allocation5 + $0x118] sm:$0xff]
    %v363 = vld [vmem:[#allocation5 + $0x120] sm:$0xff]
    %v364 = vld [vmem:[#allocation5 + $0x128] sm:$0xff]
    %v365 = vld [vmem:[#allocation5 + $0x130] sm:$0xff]
    %v366 = vld [vmem:[#allocation5 + $0x138] sm:$0xff]
    %v367 = vld [vmem:[#allocation5 + $0x140] sm:$0xff]
    %v368 = vld [vmem:[#allocation5 + $0x148] sm:$0xff]
    %v369 = vld [vmem:[#allocation5 + $0x150] sm:$0xff]
    %v370 = vld [vmem:[#allocation5 + $0x158] sm:$0xff]
    %v371 = vld [vmem:[#allocation5 + $0x160] sm:$0xff]
    %v372 = vld [vmem:[#allocation5 + $0x168] sm:$0xff]
    %v373 = vld [vmem:[#allocation5 + $0x170] sm:$0xff]
    %v374 = vld [vmem:[#allocation5 + $0x178] sm:$0xff]
    %v375 = vld [vmem:[#allocation5 + $0x180] sm:$0xff]
    %v376 = vld [vmem:[#allocation5 + $0x188] sm:$0xff]
    %v377 = vld [vmem:[#allocation5 + $0x190] sm:$0xff]
    %v378 = vld [vmem:[#allocation5 + $0x198] sm:$0xff]
    %v379 = vld [vmem:[#allocation5 + $0x1a0] sm:$0xff]
    %v380 = vld [vmem:[#allocation5 + $0x1a8] sm:$0xff]
    %v381 = vld [vmem:[#allocation5 + $0x1b0] sm:$0xff]
    %v382 = vld [vmem:[#allocation5 + $0x1b8] sm:$0xff]
    %v383 = vld [vmem:[#allocation5 + $0x1c0] sm:$0xff]
    %v384 = vld [vmem:[#allocation5 + $0x1c8] sm:$0xff]
    %v385 = vld [vmem:[#allocation5 + $0x1d0] sm:$0xff]
    %v386 = vld [vmem:[#allocation5 + $0x1d8] sm:$0xff]
    %v387 = vld [vmem:[#allocation5 + $0x1e0] sm:$0xff]
    %v388 = vld [vmem:[#allocation5 + $0x1e8] sm:$0xff]
    %v389 = vld [vmem:[#allocation5 + $0x1f0] sm:$0xff]
    %v390 = vld [vmem:[#allocation5 + $0x1f8] sm:$0xff]
    %v391 = vld [vmem:[%s6] sm:$0xf]
    %v393 = vlaneseq
    %v394 = vshrl.u32 %v393, 7
    %v395 = vsub.s32 0, %v394
    %v396 = vrot.slane %v391, %v395
    %v397 = vlaneseq
    %v398 = vshrl.u32 %v397, 7
    %v399 = vsub.s32 1, %v398
    %v400 = vrot.slane %v391, %v399
    %v401 = vlaneseq
    %v402 = vshrl.u32 %v401, 7
    %v403 = vsub.s32 2, %v402
    %v404 = vrot.slane %v391, %v403
    %v405 = vlaneseq
    %v406 = vshrl.u32 %v405, 7
    %v407 = vsub.s32 3, %v406
    %v408 = vrot.slane %v391, %v407
    %v477 = vunpack.c.l.b16 %v327
    %v478 = vunpack.c.h.b16 %v327
    %v479 = vunpack.c.l.b16 %v328
    %v480 = vunpack.c.h.b16 %v328
    %v481 = vunpack.c.l.b16 %v329
    %v482 = vunpack.c.h.b16 %v329
    %v483 = vunpack.c.l.b16 %v330
    %v484 = vunpack.c.h.b16 %v330
    %v485 = vunpack.c.l.b16 %v331
    %v486 = vunpack.c.h.b16 %v331
    %v487 = vunpack.c.l.b16 %v332
    %v488 = vunpack.c.h.b16 %v332
    %v489 = vunpack.c.l.b16 %v333
    %v490 = vunpack.c.h.b16 %v333
    %v491 = vunpack.c.l.b16 %v334
    %v492 = vunpack.c.h.b16 %v334
    %v493 = vunpack.c.l.b16 %v335
    %v494 = vunpack.c.h.b16 %v335
    %v495 = vunpack.c.l.b16 %v336
    %v496 = vunpack.c.h.b16 %v336
    %v497 = vunpack.c.l.b16 %v337
    %v498 = vunpack.c.h.b16 %v337
    %v499 = vunpack.c.l.b16 %v338
    %v500 = vunpack.c.h.b16 %v338
    %v501 = vunpack.c.l.b16 %v339
    %v502 = vunpack.c.h.b16 %v339
    %v503 = vunpack.c.l.b16 %v340
    %v504 = vunpack.c.h.b16 %v340
    %v505 = vunpack.c.l.b16 %v341
    %v506 = vunpack.c.h.b16 %v341
    %v507 = vunpack.c.l.b16 %v342
    %v508 = vunpack.c.h.b16 %v342
    %v509 = vunpack.c.l.b16 %v343
    %v510 = vunpack.c.h.b16 %v343
    %v511 = vunpack.c.l.b16 %v344
    %v512 = vunpack.c.h.b16 %v344
    %v513 = vunpack.c.l.b16 %v345
    %v514 = vunpack.c.h.b16 %v345
    %v515 = vunpack.c.l.b16 %v346
    %v516 = vunpack.c.h.b16 %v346
    %v517 = vunpack.c.l.b16 %v347
    %v518 = vunpack.c.h.b16 %v347
    %v519 = vunpack.c.l.b16 %v348
    %v520 = vunpack.c.h.b16 %v348
    %v521 = vunpack.c.l.b16 %v349
    %v522 = vunpack.c.h.b16 %v349
    %v523 = vunpack.c.l.b16 %v350
    %v524 = vunpack.c.h.b16 %v350
    %v525 = vunpack.c.l.b16 %v351
    %v526 = vunpack.c.h.b16 %v351
    %v527 = vunpack.c.l.b16 %v352
    %v528 = vunpack.c.h.b16 %v352
    %v529 = vunpack.c.l.b16 %v353
    %v530 = vunpack.c.h.b16 %v353
    %v531 = vunpack.c.l.b16 %v354
    %v532 = vunpack.c.h.b16 %v354
    %v533 = vunpack.c.l.b16 %v355
    %v534 = vunpack.c.h.b16 %v355
    %v535 = vunpack.c.l.b16 %v356
    %v536 = vunpack.c.h.b16 %v356
    %v537 = vunpack.c.l.b16 %v357
    %v538 = vunpack.c.h.b16 %v357
    %v539 = vunpack.c.l.b16 %v358
    %v540 = vunpack.c.h.b16 %v358
    %v541 = vunpack.c.l.b16 %v359
    %v542 = vunpack.c.h.b16 %v359
    %v543 = vunpack.c.l.b16 %v360
    %v544 = vunpack.c.h.b16 %v360
    %v545 = vunpack.c.l.b16 %v361
    %v546 = vunpack.c.h.b16 %v361
    %v547 = vunpack.c.l.b16 %v362
    %v548 = vunpack.c.h.b16 %v362
    %v549 = vunpack.c.l.b16 %v363
    %v550 = vunpack.c.h.b16 %v363
    %v551 = vunpack.c.l.b16 %v364
    %v552 = vunpack.c.h.b16 %v364
    %v553 = vunpack.c.l.b16 %v365
    %v554 = vunpack.c.h.b16 %v365
    %v555 = vunpack.c.l.b16 %v366
    %v556 = vunpack.c.h.b16 %v366
    %v557 = vunpack.c.l.b16 %v367
    %v558 = vunpack.c.h.b16 %v367
    %v559 = vunpack.c.l.b16 %v368
    %v560 = vunpack.c.h.b16 %v368
    %v561 = vunpack.c.l.b16 %v369
    %v562 = vunpack.c.h.b16 %v369
    %v563 = vunpack.c.l.b16 %v370
    %v564 = vunpack.c.h.b16 %v370
    %v565 = vunpack.c.l.b16 %v371
    %v566 = vunpack.c.h.b16 %v371
    %v567 = vunpack.c.l.b16 %v372
    %v568 = vunpack.c.h.b16 %v372
    %v569 = vunpack.c.l.b16 %v373
    %v570 = vunpack.c.h.b16 %v373
    %v571 = vunpack.c.l.b16 %v374
    %v572 = vunpack.c.h.b16 %v374
    %v573 = vunpack.c.l.b16 %v375
    %v574 = vunpack.c.h.b16 %v375
    %v575 = vunpack.c.l.b16 %v376
    %v576 = vunpack.c.h.b16 %v376
    %v577 = vunpack.c.l.b16 %v377
    %v578 = vunpack.c.h.b16 %v377
    %v579 = vunpack.c.l.b16 %v378
    %v580 = vunpack.c.h.b16 %v378
    %v581 = vunpack.c.l.b16 %v379
    %v582 = vunpack.c.h.b16 %v379
    %v583 = vunpack.c.l.b16 %v380
    %v584 = vunpack.c.h.b16 %v380
    %v585 = vunpack.c.l.b16 %v381
    %v586 = vunpack.c.h.b16 %v381
    %v587 = vunpack.c.l.b16 %v382
    %v588 = vunpack.c.h.b16 %v382
    %v589 = vunpack.c.l.b16 %v383
    %v590 = vunpack.c.h.b16 %v383
    %v591 = vunpack.c.l.b16 %v384
    %v592 = vunpack.c.h.b16 %v384
    %v593 = vunpack.c.l.b16 %v385
    %v594 = vunpack.c.h.b16 %v385
    %v595 = vunpack.c.l.b16 %v386
    %v596 = vunpack.c.h.b16 %v386
    %v597 = vunpack.c.l.b16 %v387
    %v598 = vunpack.c.h.b16 %v387
    %v599 = vunpack.c.l.b16 %v388
    %v600 = vunpack.c.h.b16 %v388
    %v601 = vunpack.c.l.b16 %v389
    %v602 = vunpack.c.h.b16 %v389
    %v603 = vunpack.c.l.b16 %v390
    %v604 = vunpack.c.h.b16 %v390
    %v605 = vpack.c.b16 %v481, %v477
    %v606 = vpack.c.b16 %v482, %v478
    %v607 = vpack.c.b16 %v483, %v479
    %v608 = vpack.c.b16 %v484, %v480
    %v609 = vpack.c.b16 %v489, %v485
    %v610 = vpack.c.b16 %v490, %v486
    %v611 = vpack.c.b16 %v491, %v487
    %v612 = vpack.c.b16 %v492, %v488
    %v613 = vpack.c.b16 %v497, %v493
    %v614 = vpack.c.b16 %v498, %v494
    %v615 = vpack.c.b16 %v499, %v495
    %v616 = vpack.c.b16 %v500, %v496
    %v617 = vpack.c.b16 %v505, %v501
    %v618 = vpack.c.b16 %v506, %v502
    %v619 = vpack.c.b16 %v507, %v503
    %v620 = vpack.c.b16 %v508, %v504
    %v621 = vpack.c.b16 %v513, %v509
    %v622 = vpack.c.b16 %v514, %v510
    %v623 = vpack.c.b16 %v515, %v511
    %v624 = vpack.c.b16 %v516, %v512
    %v625 = vpack.c.b16 %v521, %v517
    %v626 = vpack.c.b16 %v522, %v518
    %v627 = vpack.c.b16 %v523, %v519
    %v628 = vpack.c.b16 %v524, %v520
    %v629 = vpack.c.b16 %v529, %v525
    %v630 = vpack.c.b16 %v530, %v526
    %v631 = vpack.c.b16 %v531, %v527
    %v632 = vpack.c.b16 %v532, %v528
    %v633 = vpack.c.b16 %v537, %v533
    %v634 = vpack.c.b16 %v538, %v534
    %v635 = vpack.c.b16 %v539, %v535
    %v636 = vpack.c.b16 %v540, %v536
    %v637 = vpack.c.b16 %v545, %v541
    %v638 = vpack.c.b16 %v546, %v542
    %v639 = vpack.c.b16 %v547, %v543
    %v640 = vpack.c.b16 %v548, %v544
    %v641 = vpack.c.b16 %v553, %v549
    %v642 = vpack.c.b16 %v554, %v550
    %v643 = vpack.c.b16 %v555, %v551
    %v644 = vpack.c.b16 %v556, %v552
    %v645 = vpack.c.b16 %v561, %v557
    %v646 = vpack.c.b16 %v562, %v558
    %v647 = vpack.c.b16 %v563, %v559
    %v648 = vpack.c.b16 %v564, %v560
    %v649 = vpack.c.b16 %v569, %v565
    %v650 = vpack.c.b16 %v570, %v566
    %v651 = vpack.c.b16 %v571, %v567
    %v652 = vpack.c.b16 %v572, %v568
    %v653 = vpack.c.b16 %v577, %v573
    %v654 = vpack.c.b16 %v578, %v574
    %v655 = vpack.c.b16 %v579, %v575
    %v656 = vpack.c.b16 %v580, %v576
    %v657 = vpack.c.b16 %v585, %v581
    %v658 = vpack.c.b16 %v586, %v582
    %v659 = vpack.c.b16 %v587, %v583
    %v660 = vpack.c.b16 %v588, %v584
    %v661 = vpack.c.b16 %v593, %v589
    %v662 = vpack.c.b16 %v594, %v590
    %v663 = vpack.c.b16 %v595, %v591
    %v664 = vpack.c.b16 %v596, %v592
    %v665 = vpack.c.b16 %v601, %v597
    %v666 = vpack.c.b16 %v602, %v598
    %v667 = vpack.c.b16 %v603, %v599
    %v668 = vpack.c.b16 %v604, %v600
    %733 = vmatprep.subr.bf16.mxu0 %v606
    %734 = vmatpush1.bf16.msra.mxu0 %v605
    %735 = vmatprep.subr.bf16.mxu0 %v610
    %736 = vmatpush1.bf16.msra.mxu0 %v609
    %737 = vmatprep.subr.bf16.mxu0 %v614
    %738 = vmatpush1.bf16.msra.mxu0 %v613
    %739 = vmatprep.subr.bf16.mxu0 %v618
    %740 = vmatpush1.bf16.msra.mxu0 %v617
    %741 = vmatprep.subr.bf16.mxu0 %v622
    %742 = vmatpush1.bf16.msra.mxu0 %v621
    %743 = vmatprep.subr.bf16.mxu0 %v626
    %744 = vmatpush1.bf16.msra.mxu0 %v625
    %745 = vmatprep.subr.bf16.mxu0 %v630
    %746 = vmatpush1.bf16.msra.mxu0 %v629
    %747 = vmatprep.subr.bf16.mxu0 %v634
    %748 = vmatpush1.bf16.msra.mxu0 %v633
    %749 = vmatprep.subr.bf16.mxu0 %v638
    %750 = vmatpush1.bf16.msra.mxu0 %v637
    %751 = vmatprep.subr.bf16.mxu0 %v642
    %752 = vmatpush1.bf16.msra.mxu0 %v641
    %753 = vmatprep.subr.bf16.mxu0 %v646
    %754 = vmatpush1.bf16.msra.mxu0 %v645
    %755 = vmatprep.subr.bf16.mxu0 %v650
    %756 = vmatpush1.bf16.msra.mxu0 %v649
    %757 = vmatprep.subr.bf16.mxu0 %v654
    %758 = vmatpush1.bf16.msra.mxu0 %v653
    %759 = vmatprep.subr.bf16.mxu0 %v658
    %760 = vmatpush1.bf16.msra.mxu0 %v657
    %761 = vmatprep.subr.bf16.mxu0 %v662
    %762 = vmatpush1.bf16.msra.mxu0 %v661
    %763 = vmatprep.subr.bf16.mxu0 %v666
    %764 = vmatpush1.bf16.msra.mxu0 %v665
    %765 = vmatprep.mubr.bf16.mxu0 %v326
    %766 = vmatmul.mubr.bf16.gmra.mrb[0].mxu0 %v325
    %v767 = vpop.f32.mrb[0].mxu0
    %v768 = vadd.f32 %v396, %v767
    %v769 = vpop.f32.mrb[0].mxu0
    %v770 = vadd.f32 %v400, %v769
    %v771 = vpop.f32.mrb[0].mxu0
    %v772 = vpop.f32.mrb[0].mxu0
    %773 = vdwg.mxu0
    %774 = vmatprep.subr.bf16.mxu0 %v608
    %775 = vmatpush1.bf16.msra.mxu0 %v607
    %776 = vmatprep.subr.bf16.mxu0 %v612
    %777 = vmatpush1.bf16.msra.mxu0 %v611
    %778 = vmatprep.subr.bf16.mxu0 %v616
    %779 = vmatpush1.bf16.msra.mxu0 %v615
    %780 = vmatprep.subr.bf16.mxu0 %v620
    %781 = vmatpush1.bf16.msra.mxu0 %v619
    %782 = vmatprep.subr.bf16.mxu0 %v624
    %783 = vmatpush1.bf16.msra.mxu0 %v623
    %784 = vmatprep.subr.bf16.mxu0 %v628
    %785 = vmatpush1.bf16.msra.mxu0 %v627
    %786 = vmatprep.subr.bf16.mxu0 %v632
    %787 = vmatpush1.bf16.msra.mxu0 %v631
    %788 = vmatprep.subr.bf16.mxu0 %v636
    %789 = vmatpush1.bf16.msra.mxu0 %v635
    %790 = vmatprep.subr.bf16.mxu0 %v640
    %791 = vmatpush1.bf16.msra.mxu0 %v639
    %792 = vmatprep.subr.bf16.mxu0 %v644
    %793 = vmatpush1.bf16.msra.mxu0 %v643
    %794 = vmatprep.subr.bf16.mxu0 %v648
    %795 = vmatpush1.bf16.msra.mxu0 %v647
    %796 = vmatprep.subr.bf16.mxu0 %v652
    %797 = vmatpush1.bf16.msra.mxu0 %v651
    %798 = vmatprep.subr.bf16.mxu0 %v656
    %799 = vmatpush1.bf16.msra.mxu0 %v655
    %800 = vmatprep.subr.bf16.mxu0 %v660
    %801 = vmatpush1.bf16.msra.mxu0 %v659
    %802 = vmatprep.subr.bf16.mxu0 %v664
    %803 = vmatpush1.bf16.msra.mxu0 %v663
    %804 = vmatprep.subr.bf16.mxu0 %v668
    %805 = vmatpush1.bf16.msra.mxu0 %v667
    %806 = vmatprep.mubr.bf16.mxu0 %v326
    %807 = vmatmul.mubr.bf16.gmra.mrb[0].mxu0 %v325
    %v808 = vpop.f32.mrb[0].mxu0
    %v809 = vadd.f32 %v404, %v808
    %v810 = vpop.f32.mrb[0].mxu0
    %v811 = vadd.f32 %v408, %v810
    %v812 = vpop.f32.mrb[0].mxu0
    %v813 = vpop.f32.mrb[0].mxu0
    %814 = vdwg.mxu0
    %v815 = vtanh.pop %v768
    %v816 = vtanh.pop %v770
    %v817 = vtanh.pop %v809
    %v818 = vtanh.pop %v811
    %v819 = vpack.c.bf16 %v815, %v815
    %v820 = vpack.c.bf16 %v816, %v816
    %v821 = vpack.c.bf16 %v817, %v817
    %v822 = vpack.c.bf16 %v818, %v818
    %v823 = vld [vmem:[#allocation7] sm:$0xff]
    %v824 = vld [vmem:[#allocation7 + $0x8] sm:$0xff]
    %v825 = vld [vmem:[#allocation7 + $0x10] sm:$0xff]
    %v826 = vld [vmem:[#allocation7 + $0x18] sm:$0xff]
    %v827 = vld [vmem:[#allocation7 + $0x20] sm:$0xff]
    %v828 = vld [vmem:[#allocation7 + $0x28] sm:$0xff]
    %v829 = vld [vmem:[#allocation7 + $0x30] sm:$0xff]
    %v830 = vld [vmem:[#allocation7 + $0x38] sm:$0xff]
    %v831 = vld [vmem:[#allocation7 + $0x40] sm:$0xff]
    %v832 = vld [vmem:[#allocation7 + $0x48] sm:$0xff]
    %v833 = vld [vmem:[#allocation7 + $0x50] sm:$0xff]
    %v834 = vld [vmem:[#allocation7 + $0x58] sm:$0xff]
    %v835 = vld [vmem:[#allocation7 + $0x60] sm:$0xff]
    %v836 = vld [vmem:[#allocation7 + $0x68] sm:$0xff]
    %v837 = vld [vmem:[#allocation7 + $0x70] sm:$0xff]
    %v838 = vld [vmem:[#allocation7 + $0x78] sm:$0xff]
    %v839 = vld [vmem:[#allocation7 + $0x80] sm:$0xff]
    %v840 = vld [vmem:[#allocation7 + $0x88] sm:$0xff]
    %v841 = vld [vmem:[#allocation7 + $0x90] sm:$0xff]
    %v842 = vld [vmem:[#allocation7 + $0x98] sm:$0xff]
    %v843 = vld [vmem:[#allocation7 + $0xa0] sm:$0xff]
    %v844 = vld [vmem:[#allocation7 + $0xa8] sm:$0xff]
    %v845 = vld [vmem:[#allocation7 + $0xb0] sm:$0xff]
    %v846 = vld [vmem:[#allocation7 + $0xb8] sm:$0xff]
    %v847 = vld [vmem:[#allocation7 + $0xc0] sm:$0xff]
    %v848 = vld [vmem:[#allocation7 + $0xc8] sm:$0xff]
    %v849 = vld [vmem:[#allocation7 + $0xd0] sm:$0xff]
    %v850 = vld [vmem:[#allocation7 + $0xd8] sm:$0xff]
    %v851 = vld [vmem:[#allocation7 + $0xe0] sm:$0xff]
    %v852 = vld [vmem:[#allocation7 + $0xe8] sm:$0xff]
    %v853 = vld [vmem:[#allocation7 + $0xf0] sm:$0xff]
    %v854 = vld [vmem:[#allocation7 + $0xf8] sm:$0xff]
    %v855 = vld [vmem:[#allocation7 + $0x100] sm:$0xff]
    %v856 = vld [vmem:[#allocation7 + $0x108] sm:$0xff]
    %v857 = vld [vmem:[#allocation7 + $0x110] sm:$0xff]
    %v858 = vld [vmem:[#allocation7 + $0x118] sm:$0xff]
    %v859 = vld [vmem:[#allocation7 + $0x120] sm:$0xff]
    %v860 = vld [vmem:[#allocation7 + $0x128] sm:$0xff]
    %v861 = vld [vmem:[#allocation7 + $0x130] sm:$0xff]
    %v862 = vld [vmem:[#allocation7 + $0x138] sm:$0xff]
    %v863 = vld [vmem:[#allocation7 + $0x140] sm:$0xff]
    %v864 = vld [vmem:[#allocation7 + $0x148] sm:$0xff]
    %v865 = vld [vmem:[#allocation7 + $0x150] sm:$0xff]
    %v866 = vld [vmem:[#allocation7 + $0x158] sm:$0xff]
    %v867 = vld [vmem:[#allocation7 + $0x160] sm:$0xff]
    %v868 = vld [vmem:[#allocation7 + $0x168] sm:$0xff]
    %v869 = vld [vmem:[#allocation7 + $0x170] sm:$0xff]
    %v870 = vld [vmem:[#allocation7 + $0x178] sm:$0xff]
    %v871 = vld [vmem:[#allocation7 + $0x180] sm:$0xff]
    %v872 = vld [vmem:[#allocation7 + $0x188] sm:$0xff]
    %v873 = vld [vmem:[#allocation7 + $0x190] sm:$0xff]
    %v874 = vld [vmem:[#allocation7 + $0x198] sm:$0xff]
    %v875 = vld [vmem:[#allocation7 + $0x1a0] sm:$0xff]
    %v876 = vld [vmem:[#allocation7 + $0x1a8] sm:$0xff]
    %v877 = vld [vmem:[#allocation7 + $0x1b0] sm:$0xff]
    %v878 = vld [vmem:[#allocation7 + $0x1b8] sm:$0xff]
    %v879 = vld [vmem:[#allocation7 + $0x1c0] sm:$0xff]
    %v880 = vld [vmem:[#allocation7 + $0x1c8] sm:$0xff]
    %v881 = vld [vmem:[#allocation7 + $0x1d0] sm:$0xff]
    %v882 = vld [vmem:[#allocation7 + $0x1d8] sm:$0xff]
    %v883 = vld [vmem:[#allocation7 + $0x1e0] sm:$0xff]
    %v884 = vld [vmem:[#allocation7 + $0x1e8] sm:$0xff]
    %v885 = vld [vmem:[#allocation7 + $0x1f0] sm:$0xff]
    %v886 = vld [vmem:[#allocation7 + $0x1f8] sm:$0xff]
    %v887 = vld [vmem:[%s8] sm:$0x3]
    %v889 = vlaneseq
    %v890 = vshrl.u32 %v889, 7
    %v891 = vsub.s32 0, %v890
    %v892 = vrot.slane %v887, %v891
    %v893 = vlaneseq
    %v894 = vshrl.u32 %v893, 7
    %v895 = vsub.s32 1, %v894
    %v896 = vrot.slane %v887, %v895
    %v963 = vunpack.c.l.b16 %v823
    %v964 = vunpack.c.h.b16 %v823
    %v965 = vunpack.c.l.b16 %v824
    %v966 = vunpack.c.h.b16 %v824
    %v967 = vunpack.c.l.b16 %v825
    %v968 = vunpack.c.h.b16 %v825
    %v969 = vunpack.c.l.b16 %v826
    %v970 = vunpack.c.h.b16 %v826
    %v971 = vunpack.c.l.b16 %v827
    %v972 = vunpack.c.h.b16 %v827
    %v973 = vunpack.c.l.b16 %v828
    %v974 = vunpack.c.h.b16 %v828
    %v975 = vunpack.c.l.b16 %v829
    %v976 = vunpack.c.h.b16 %v829
    %v977 = vunpack.c.l.b16 %v830
    %v978 = vunpack.c.h.b16 %v830
    %v979 = vunpack.c.l.b16 %v831
    %v980 = vunpack.c.h.b16 %v831
    %v981 = vunpack.c.l.b16 %v832
    %v982 = vunpack.c.h.b16 %v832
    %v983 = vunpack.c.l.b16 %v833
    %v984 = vunpack.c.h.b16 %v833
    %v985 = vunpack.c.l.b16 %v834
    %v986 = vunpack.c.h.b16 %v834
    %v987 = vunpack.c.l.b16 %v835
    %v988 = vunpack.c.h.b16 %v835
    %v989 = vunpack.c.l.b16 %v836
    %v990 = vunpack.c.h.b16 %v836
    %v991 = vunpack.c.l.b16 %v837
    %v992 = vunpack.c.h.b16 %v837
    %v993 = vunpack.c.l.b16 %v838
    %v994 = vunpack.c.h.b16 %v838
    %v995 = vunpack.c.l.b16 %v839
    %v996 = vunpack.c.h.b16 %v839
    %v997 = vunpack.c.l.b16 %v840
    %v998 = vunpack.c.h.b16 %v840
    %v999 = vunpack.c.l.b16 %v841
    %v1000 = vunpack.c.h.b16 %v841
    %v1001 = vunpack.c.l.b16 %v842
    %v1002 = vunpack.c.h.b16 %v842
    %v1003 = vunpack.c.l.b16 %v843
    %v1004 = vunpack.c.h.b16 %v843
    %v1005 = vunpack.c.l.b16 %v844
    %v1006 = vunpack.c.h.b16 %v844
    %v1007 = vunpack.c.l.b16 %v845
    %v1008 = vunpack.c.h.b16 %v845
    %v1009 = vunpack.c.l.b16 %v846
    %v1010 = vunpack.c.h.b16 %v846
    %v1011 = vunpack.c.l.b16 %v847
    %v1012 = vunpack.c.h.b16 %v847
    %v1013 = vunpack.c.l.b16 %v848
    %v1014 = vunpack.c.h.b16 %v848
    %v1015 = vunpack.c.l.b16 %v849
    %v1016 = vunpack.c.h.b16 %v849
    %v1017 = vunpack.c.l.b16 %v850
    %v1018 = vunpack.c.h.b16 %v850
    %v1019 = vunpack.c.l.b16 %v851
    %v1020 = vunpack.c.h.b16 %v851
    %v1021 = vunpack.c.l.b16 %v852
    %v1022 = vunpack.c.h.b16 %v852
    %v1023 = vunpack.c.l.b16 %v853
    %v1024 = vunpack.c.h.b16 %v853
    %v1025 = vunpack.c.l.b16 %v854
    %v1026 = vunpack.c.h.b16 %v854
    %v1027 = vunpack.c.l.b16 %v855
    %v1028 = vunpack.c.h.b16 %v855
    %v1029 = vunpack.c.l.b16 %v856
    %v1030 = vunpack.c.h.b16 %v856
    %v1031 = vunpack.c.l.b16 %v857
    %v1032 = vunpack.c.h.b16 %v857
    %v1033 = vunpack.c.l.b16 %v858
    %v1034 = vunpack.c.h.b16 %v858
    %v1035 = vunpack.c.l.b16 %v859
    %v1036 = vunpack.c.h.b16 %v859
    %v1037 = vunpack.c.l.b16 %v860
    %v1038 = vunpack.c.h.b16 %v860
    %v1039 = vunpack.c.l.b16 %v861
    %v1040 = vunpack.c.h.b16 %v861
    %v1041 = vunpack.c.l.b16 %v862
    %v1042 = vunpack.c.h.b16 %v862
    %v1043 = vunpack.c.l.b16 %v863
    %v1044 = vunpack.c.h.b16 %v863
    %v1045 = vunpack.c.l.b16 %v864
    %v1046 = vunpack.c.h.b16 %v864
    %v1047 = vunpack.c.l.b16 %v865
    %v1048 = vunpack.c.h.b16 %v865
    %v1049 = vunpack.c.l.b16 %v866
    %v1050 = vunpack.c.h.b16 %v866
    %v1051 = vunpack.c.l.b16 %v867
    %v1052 = vunpack.c.h.b16 %v867
    %v1053 = vunpack.c.l.b16 %v868
    %v1054 = vunpack.c.h.b16 %v868
    %v1055 = vunpack.c.l.b16 %v869
    %v1056 = vunpack.c.h.b16 %v869
    %v1057 = vunpack.c.l.b16 %v870
    %v1058 = vunpack.c.h.b16 %v870
    %v1059 = vunpack.c.l.b16 %v871
    %v1060 = vunpack.c.h.b16 %v871
    %v1061 = vunpack.c.l.b16 %v872
    %v1062 = vunpack.c.h.b16 %v872
    %v1063 = vunpack.c.l.b16 %v873
    %v1064 = vunpack.c.h.b16 %v873
    %v1065 = vunpack.c.l.b16 %v874
    %v1066 = vunpack.c.h.b16 %v874
    %v1067 = vunpack.c.l.b16 %v875
    %v1068 = vunpack.c.h.b16 %v875
    %v1069 = vunpack.c.l.b16 %v876
    %v1070 = vunpack.c.h.b16 %v876
    %v1071 = vunpack.c.l.b16 %v877
    %v1072 = vunpack.c.h.b16 %v877
    %v1073 = vunpack.c.l.b16 %v878
    %v1074 = vunpack.c.h.b16 %v878
    %v1075 = vunpack.c.l.b16 %v879
    %v1076 = vunpack.c.h.b16 %v879
    %v1077 = vunpack.c.l.b16 %v880
    %v1078 = vunpack.c.h.b16 %v880
    %v1079 = vunpack.c.l.b16 %v881
    %v1080 = vunpack.c.h.b16 %v881
    %v1081 = vunpack.c.l.b16 %v882
    %v1082 = vunpack.c.h.b16 %v882
    %v1083 = vunpack.c.l.b16 %v883
    %v1084 = vunpack.c.h.b16 %v883
    %v1085 = vunpack.c.l.b16 %v884
    %v1086 = vunpack.c.h.b16 %v884
    %v1087 = vunpack.c.l.b16 %v885
    %v1088 = vunpack.c.h.b16 %v885
    %v1089 = vunpack.c.l.b16 %v886
    %v1090 = vunpack.c.h.b16 %v886
    %v1091 = vpack.c.b16 %v965, %v963
    %v1092 = vpack.c.b16 %v966, %v964
    %v1093 = vpack.c.b16 %v969, %v967
    %v1094 = vpack.c.b16 %v970, %v968
    %v1095 = vpack.c.b16 %v973, %v971
    %v1096 = vpack.c.b16 %v974, %v972
    %v1097 = vpack.c.b16 %v977, %v975
    %v1098 = vpack.c.b16 %v978, %v976
    %v1099 = vpack.c.b16 %v981, %v979
    %v1100 = vpack.c.b16 %v982, %v980
    %v1101 = vpack.c.b16 %v985, %v983
    %v1102 = vpack.c.b16 %v986, %v984
    %v1103 = vpack.c.b16 %v989, %v987
    %v1104 = vpack.c.b16 %v990, %v988
    %v1105 = vpack.c.b16 %v993, %v991
    %v1106 = vpack.c.b16 %v994, %v992
    %v1107 = vpack.c.b16 %v997, %v995
    %v1108 = vpack.c.b16 %v998, %v996
    %v1109 = vpack.c.b16 %v1001, %v999
    %v1110 = vpack.c.b16 %v1002, %v1000
    %v1111 = vpack.c.b16 %v1005, %v1003
    %v1112 = vpack.c.b16 %v1006, %v1004
    %v1113 = vpack.c.b16 %v1009, %v1007
    %v1114 = vpack.c.b16 %v1010, %v1008
    %v1115 = vpack.c.b16 %v1013, %v1011
    %v1116 = vpack.c.b16 %v1014, %v1012
    %v1117 = vpack.c.b16 %v1017, %v1015
    %v1118 = vpack.c.b16 %v1018, %v1016
    %v1119 = vpack.c.b16 %v1021, %v1019
    %v1120 = vpack.c.b16 %v1022, %v1020
    %v1121 = vpack.c.b16 %v1025, %v1023
    %v1122 = vpack.c.b16 %v1026, %v1024
    %v1123 = vpack.c.b16 %v1029, %v1027
    %v1124 = vpack.c.b16 %v1030, %v1028
    %v1125 = vpack.c.b16 %v1033, %v1031
    %v1126 = vpack.c.b16 %v1034, %v1032
    %v1127 = vpack.c.b16 %v1037, %v1035
    %v1128 = vpack.c.b16 %v1038, %v1036
    %v1129 = vpack.c.b16 %v1041, %v1039
    %v1130 = vpack.c.b16 %v1042, %v1040
    %v1131 = vpack.c.b16 %v1045, %v1043
    %v1132 = vpack.c.b16 %v1046, %v1044
    %v1133 = vpack.c.b16 %v1049, %v1047
    %v1134 = vpack.c.b16 %v1050, %v1048
    %v1135 = vpack.c.b16 %v1053, %v1051
    %v1136 = vpack.c.b16 %v1054, %v1052
    %v1137 = vpack.c.b16 %v1057, %v1055
    %v1138 = vpack.c.b16 %v1058, %v1056
    %v1139 = vpack.c.b16 %v1061, %v1059
    %v1140 = vpack.c.b16 %v1062, %v1060
    %v1141 = vpack.c.b16 %v1065, %v1063
    %v1142 = vpack.c.b16 %v1066, %v1064
    %v1143 = vpack.c.b16 %v1069, %v1067
    %v1144 = vpack.c.b16 %v1070, %v1068
    %v1145 = vpack.c.b16 %v1073, %v1071
    %v1146 = vpack.c.b16 %v1074, %v1072
    %v1147 = vpack.c.b16 %v1077, %v1075
    %v1148 = vpack.c.b16 %v1078, %v1076
    %v1149 = vpack.c.b16 %v1081, %v1079
    %v1150 = vpack.c.b16 %v1082, %v1080
    %v1151 = vpack.c.b16 %v1085, %v1083
    %v1152 = vpack.c.b16 %v1086, %v1084
    %v1153 = vpack.c.b16 %v1089, %v1087
    %v1154 = vpack.c.b16 %v1090, %v1088
    %1219 = vmatprep.subr.bf16.mxu0 %v1092
    %1220 = vmatpush1.bf16.msra.mxu0 %v1091
    %1221 = vmatprep.subr.bf16.mxu0 %v1094
    %1222 = vmatpush1.bf16.msra.mxu0 %v1093
    %1223 = vmatprep.subr.bf16.mxu0 %v1096
    %1224 = vmatpush1.bf16.msra.mxu0 %v1095
    %1225 = vmatprep.subr.bf16.mxu0 %v1098
    %1226 = vmatpush1.bf16.msra.mxu0 %v1097
    %1227 = vmatprep.subr.bf16.mxu0 %v1100
    %1228 = vmatpush1.bf16.msra.mxu0 %v1099
    %1229 = vmatprep.subr.bf16.mxu0 %v1102
    %1230 = vmatpush1.bf16.msra.mxu0 %v1101
    %1231 = vmatprep.subr.bf16.mxu0 %v1104
    %1232 = vmatpush1.bf16.msra.mxu0 %v1103
    %1233 = vmatprep.subr.bf16.mxu0 %v1106
    %1234 = vmatpush1.bf16.msra.mxu0 %v1105
    %1235 = vmatprep.subr.bf16.mxu0 %v1108
    %1236 = vmatpush1.bf16.msra.mxu0 %v1107
    %1237 = vmatprep.subr.bf16.mxu0 %v1110
    %1238 = vmatpush1.bf16.msra.mxu0 %v1109
    %1239 = vmatprep.subr.bf16.mxu0 %v1112
    %1240 = vmatpush1.bf16.msra.mxu0 %v1111
    %1241 = vmatprep.subr.bf16.mxu0 %v1114
    %1242 = vmatpush1.bf16.msra.mxu0 %v1113
    %1243 = vmatprep.subr.bf16.mxu0 %v1116
    %1244 = vmatpush1.bf16.msra.mxu0 %v1115
    %1245 = vmatprep.subr.bf16.mxu0 %v1118
    %1246 = vmatpush1.bf16.msra.mxu0 %v1117
    %1247 = vmatprep.subr.bf16.mxu0 %v1120
    %1248 = vmatpush1.bf16.msra.mxu0 %v1119
    %1249 = vmatprep.subr.bf16.mxu0 %v1122
    %1250 = vmatpush1.bf16.msra.mxu0 %v1121
    %1251 = vmatprep.mubr.bf16.mxu0 %v820
    %1252 = vmatmul.mubr.bf16.gmra.mrb[0].mxu0 %v819
    %v1253 = vpop.f32.mrb[0].mxu0
    %v1254 = vadd.f32 %v892, %v1253
    %v1255 = vpop.f32.mrb[0].mxu0
    %v1256 = vadd.f32 %v896, %v1255
    %v1257 = vpop.f32.mrb[0].mxu0
    %v1258 = vpop.f32.mrb[0].mxu0
    %1259 = vdwg.mxu0
    %1260 = vmatprep.subr.bf16.mxu0 %v1124
    %1261 = vmatpush1.bf16.msra.mxu0 %v1123
    %1262 = vmatprep.subr.bf16.mxu0 %v1126
    %1263 = vmatpush1.bf16.msra.mxu0 %v1125
    %1264 = vmatprep.subr.bf16.mxu0 %v1128
    %1265 = vmatpush1.bf16.msra.mxu0 %v1127
    %1266 = vmatprep.subr.bf16.mxu0 %v1130
    %1267 = vmatpush1.bf16.msra.mxu0 %v1129
    %1268 = vmatprep.subr.bf16.mxu0 %v1132
    %1269 = vmatpush1.bf16.msra.mxu0 %v1131
    %1270 = vmatprep.subr.bf16.mxu0 %v1134
    %1271 = vmatpush1.bf16.msra.mxu0 %v1133
    %1272 = vmatprep.subr.bf16.mxu0 %v1136
    %1273 = vmatpush1.bf16.msra.mxu0 %v1135
    %1274 = vmatprep.subr.bf16.mxu0 %v1138
    %1275 = vmatpush1.bf16.msra.mxu0 %v1137
    %1276 = vmatprep.subr.bf16.mxu0 %v1140
    %1277 = vmatpush1.bf16.msra.mxu0 %v1139
    %1278 = vmatprep.subr.bf16.mxu0 %v1142
    %1279 = vmatpush1.bf16.msra.mxu0 %v1141
    %1280 = vmatprep.subr.bf16.mxu0 %v1144
    %1281 = vmatpush1.bf16.msra.mxu0 %v1143
    %1282 = vmatprep.subr.bf16.mxu0 %v1146
    %1283 = vmatpush1.bf16.msra.mxu0 %v1145
    %1284 = vmatprep.subr.bf16.mxu0 %v1148
    %1285 = vmatpush1.bf16.msra.mxu0 %v1147
    %1286 = vmatprep.subr.bf16.mxu0 %v1150
    %1287 = vmatpush1.bf16.msra.mxu0 %v1149
    %1288 = vmatprep.subr.bf16.mxu0 %v1152
    %1289 = vmatpush1.bf16.msra.mxu0 %v1151
    %1290 = vmatprep.subr.bf16.mxu0 %v1154
    %1291 = vmatpush1.bf16.msra.mxu0 %v1153
    %1292 = vmatprep.mubr.bf16.mxu0 %v822
    %1293 = vmatmul.mubr.bf16.gmra.mrb[0].mxu0 %v821
    %v1294 = vpop.f32.mrb[0].mxu0
    %v1295 = vadd.f32 %v1254, %v1294
    %v1296 = vpop.f32.mrb[0].mxu0
    %v1297 = vadd.f32 %v1256, %v1296
    %v1298 = vpop.f32.mrb[0].mxu0
    %v1299 = vpop.f32.mrb[0].mxu0
    %1300 = vdwg.mxu0
    %v1301 = vtanh.pop %v1295
    %v1302 = vtanh.pop %v1297
    %v1303 = vpack.c.bf16 %v1301, %v1301
    %v1304 = vpack.c.bf16 %v1302, %v1302
    %v1305 = vld [vmem:[#allocation8] sm:$0xf]
    %v1306 = vld [vmem:[#allocation8 + $0x4] sm:$0xf]
    %v1307 = vld [vmem:[#allocation8 + $0x8] sm:$0xf]
    %v1308 = vld [vmem:[#allocation8 + $0xc] sm:$0xf]
    %v1309 = vld [vmem:[#allocation8 + $0x10] sm:$0xf]
    %v1310 = vld [vmem:[#allocation8 + $0x14] sm:$0xf]
    %v1311 = vld [vmem:[#allocation8 + $0x18] sm:$0xf]
    %v1312 = vld [vmem:[#allocation8 + $0x1c] sm:$0xf]
    %v1313 = vld [vmem:[#allocation8 + $0x20] sm:$0xf]
    %v1314 = vld [vmem:[#allocation8 + $0x24] sm:$0xf]
    %v1315 = vld [vmem:[#allocation8 + $0x28] sm:$0xf]
    %v1316 = vld [vmem:[#allocation8 + $0x2c] sm:$0xf]
    %v1317 = vld [vmem:[#allocation8 + $0x30] sm:$0xf]
    %v1318 = vld [vmem:[#allocation8 + $0x34] sm:$0xf]
    %v1319 = vld [vmem:[#allocation8 + $0x38] sm:$0xf]
    %v1320 = vld [vmem:[#allocation8 + $0x3c] sm:$0xf]
    %v1321 = vld [vmem:[#allocation8 + $0x40] sm:$0xf]
    %v1322 = vld [vmem:[#allocation8 + $0x44] sm:$0xf]
    %v1323 = vld [vmem:[#allocation8 + $0x48] sm:$0xf]
    %v1324 = vld [vmem:[#allocation8 + $0x4c] sm:$0xf]
    %v1325 = vld [vmem:[#allocation8 + $0x50] sm:$0xf]
    %v1326 = vld [vmem:[#allocation8 + $0x54] sm:$0xf]
    %v1327 = vld [vmem:[#allocation8 + $0x58] sm:$0xf]
    %v1328 = vld [vmem:[#allocation8 + $0x5c] sm:$0xf]
    %v1329 = vld [vmem:[#allocation8 + $0x60] sm:$0xf]
    %v1330 = vld [vmem:[#allocation8 + $0x64] sm:$0xf]
    %v1331 = vld [vmem:[#allocation8 + $0x68] sm:$0xf]
    %v1332 = vld [vmem:[#allocation8 + $0x6c] sm:$0xf]
    %v1333 = vld [vmem:[#allocation8 + $0x70] sm:$0xf]
    %v1334 = vld [vmem:[#allocation8 + $0x74] sm:$0xf]
    %v1335 = vld [vmem:[#allocation8 + $0x78] sm:$0xf]
    %v1336 = vld [vmem:[#allocation8 + $0x7c] sm:$0xf]
    %v1337 = vld [vmem:[%s10] sm:$0x1]
    %v1339 = vlaneseq
    %v1340 = vshrl.u32 %v1339, 7
    %v1341 = vsub.s32 0, %v1340
    %v1342 = vrot.slane %v1337, %v1341
    %v1376 = vunpack.c.l.b16 %v1305
    %v1377 = vunpack.c.l.b16 %v1306
    %v1378 = vunpack.c.l.b16 %v1307
    %v1379 = vunpack.c.l.b16 %v1308
    %v1380 = vunpack.c.l.b16 %v1309
    %v1381 = vunpack.c.l.b16 %v1310
    %v1382 = vunpack.c.l.b16 %v1311
    %v1383 = vunpack.c.l.b16 %v1312
    %v1384 = vunpack.c.l.b16 %v1313
    %v1385 = vunpack.c.l.b16 %v1314
    %v1386 = vunpack.c.l.b16 %v1315
    %v1387 = vunpack.c.l.b16 %v1316
    %v1388 = vunpack.c.l.b16 %v1317
    %v1389 = vunpack.c.l.b16 %v1318
    %v1390 = vunpack.c.l.b16 %v1319
    %v1391 = vunpack.c.l.b16 %v1320
    %v1392 = vunpack.c.l.b16 %v1321
    %v1393 = vunpack.c.l.b16 %v1322
    %v1394 = vunpack.c.l.b16 %v1323
    %v1395 = vunpack.c.l.b16 %v1324
    %v1396 = vunpack.c.l.b16 %v1325
    %v1397 = vunpack.c.l.b16 %v1326
    %v1398 = vunpack.c.l.b16 %v1327
    %v1399 = vunpack.c.l.b16 %v1328
    %v1400 = vunpack.c.l.b16 %v1329
    %v1401 = vunpack.c.l.b16 %v1330
    %v1402 = vunpack.c.l.b16 %v1331
    %v1403 = vunpack.c.l.b16 %v1332
    %v1404 = vunpack.c.l.b16 %v1333
    %v1405 = vunpack.c.l.b16 %v1334
    %v1406 = vunpack.c.l.b16 %v1335
    %v1407 = vunpack.c.l.b16 %v1336
    %v1408 = vpack.c.b16 %v1377, %v1376
    %v1409 = vpack.c.b16 %v1379, %v1378
    %v1410 = vpack.c.b16 %v1381, %v1380
    %v1411 = vpack.c.b16 %v1383, %v1382
    %v1412 = vpack.c.b16 %v1385, %v1384
    %v1413 = vpack.c.b16 %v1387, %v1386
    %v1414 = vpack.c.b16 %v1389, %v1388
    %v1415 = vpack.c.b16 %v1391, %v1390
    %v1416 = vpack.c.b16 %v1393, %v1392
    %v1417 = vpack.c.b16 %v1395, %v1394
    %v1418 = vpack.c.b16 %v1397, %v1396
    %v1419 = vpack.c.b16 %v1399, %v1398
    %v1420 = vpack.c.b16 %v1401, %v1400
    %v1421 = vpack.c.b16 %v1403, %v1402
    %v1422 = vpack.c.b16 %v1405, %v1404
    %v1423 = vpack.c.b16 %v1407, %v1406
    %1440 = vmatprep.subr.bf16.mxu0 0
    %1441 = vmatpush1.bf16.msra.mxu0 %v1408
    %1442 = vmatprep.subr.bf16.mxu0 0
    %1443 = vmatpush1.bf16.msra.mxu0 %v1409
    %1444 = vmatprep.subr.bf16.mxu0 0
    %1445 = vmatpush1.bf16.msra.mxu0 %v1410
    %1446 = vmatprep.subr.bf16.mxu0 0
    %1447 = vmatpush1.bf16.msra.mxu0 %v1411
    %1448 = vmatprep.subr.bf16.mxu0 0
    %1449 = vmatpush1.bf16.msra.mxu0 %v1412
    %1450 = vmatprep.subr.bf16.mxu0 0
    %1451 = vmatpush1.bf16.msra.mxu0 %v1413
    %1452 = vmatprep.subr.bf16.mxu0 0
    %1453 = vmatpush1.bf16.msra.mxu0 %v1414
    %1454 = vmatprep.subr.bf16.mxu0 0
    %1455 = vmatpush1.bf16.msra.mxu0 %v1415
    %1456 = vmatprep.subr.bf16.mxu0 0
    %1457 = vmatpush1.bf16.msra.mxu0 %v1416
    %1458 = vmatprep.subr.bf16.mxu0 0
    %1459 = vmatpush1.bf16.msra.mxu0 %v1417
    %1460 = vmatprep.subr.bf16.mxu0 0
    %1461 = vmatpush1.bf16.msra.mxu0 %v1418
    %1462 = vmatprep.subr.bf16.mxu0 0
    %1463 = vmatpush1.bf16.msra.mxu0 %v1419
    %1464 = vmatprep.subr.bf16.mxu0 0
    %1465 = vmatpush1.bf16.msra.mxu0 %v1420
    %1466 = vmatprep.subr.bf16.mxu0 0
    %1467 = vmatpush1.bf16.msra.mxu0 %v1421
    %1468 = vmatprep.subr.bf16.mxu0 0
    %1469 = vmatpush1.bf16.msra.mxu0 %v1422
    %1470 = vmatprep.subr.bf16.mxu0 0
    %1471 = vmatpush1.bf16.msra.mxu0 %v1423
    %1472 = vmatprep.mubr.bf16.mxu0 %v1304
    %1473 = vmatmul.mubr.bf16.gmra.mrb[0].mxu0 %v1303
    %v1474 = vpop.f32.mrb[0].mxu0
    %v1475 = vadd.f32 %v1342, %v1474
    %v1476 = vpop.f32.mrb[0].mxu0
    %v1477 = vpop.f32.mrb[0].mxu0
    %v1478 = vpop.f32.mrb[0].mxu0
    %1479 = vdwg.mxu0
    %v1480 = vlaneseq
    %v1481 = vand.u32 %v1480, 127
    %vm1482 = vcmp.lt.s32.totalorder %v1481, 6
    %v1483 = vsel %vm1482, %v1475, -1e+30
    %1484 = vmax.xlane.f32.xlu0 %v1483
    %v1485 = vpop.xlane.xlu0 %1484
    %v1486 = vsub.f32 %v1483, %v1485
    %v1487 = vmul.f32 %v1486, 1.442695
    %v1488 = vpow.pop %v1487
    %v1489 = vsel %vm1482, %v1488, 0.0
    %1490 = vadd.xlane.f32.xlu0 %v1489
    %v1491 = vpop.xlane.xlu0 %1490
    %v1492 = vlog2.pop %v1491
    %v1493 = vmul.f32 %v1492, 0.6931472
    %v1494 = vadd.f32 %v1485, %v1493
    %v1495 = vmul.f32 %v1489, %v1486
    %v1496 = vsel %vm1482, %v1495, 0.0
    %1497 = vadd.xlane.f32.xlu0 %v1496
    %v1498 = vpop.xlane.xlu0 %1497
    %v1499 = vrcp.pop %v1491
    %v1500 = vmul.f32 %v1498, %v1499
    %v1501 = vsub.f32 %v1493, %v1500
    %v1502 = vld [vmem:[%s2] sm:$0xff]
    %1503 = vset.pattern.permute.xlu0 0
    %1504 = vperm.xlu0 %1503, %v1502
    %v1505 = vpop.permute.xlu0 %1504
    %vm1506 = vcmp.eq.s32.totalorder %v1481, %v1505
    %v1507 = vsel %vm1506, %v1483, 0.0
    %1508 = vadd.xlane.f32.xlu0 %v1507
    %v1509 = vpop.xlane.xlu0 %1508
    %v1510 = vsub.f32 %v1509, %v1494
    %v1511 = vld [vmem:[%s1] sm:$0xf]
    %v1512 = vld [vmem:[#allocation10] sm:$0xff]
    %v1513 = vld [vmem:[#allocation10 + $0x8] sm:$0xff]
    %v1514 = vld [vmem:[#allocation10 + $0x10] sm:$0xff]
    %v1515 = vld [vmem:[#allocation10 + $0x18] sm:$0xff]
    %v1516 = vld [vmem:[#allocation10 + $0x20] sm:$0xff]
    %v1517 = vld [vmem:[#allocation10 + $0x28] sm:$0xff]
    %v1518 = vld [vmem:[#allocation10 + $0x30] sm:$0xff]
    %v1519 = vld [vmem:[#allocation10 + $0x38] sm:$0xff]
    %v1520 = vld [vmem:[#allocation10 + $0x40] sm:$0xff]
    %v1521 = vld [vmem:[#allocation10 + $0x48] sm:$0xff]
    %v1522 = vld [vmem:[#allocation10 + $0x50] sm:$0xff]
    %v1523 = vld [vmem:[#allocation10 + $0x58] sm:$0xff]
    %v1524 = vld [vmem:[#allocation10 + $0x60] sm:$0xff]
    %v1525 = vld [vmem:[#allocation10 + $0x68] sm:$0xff]
    %v1526 = vld [vmem:[#allocation10 + $0x70] sm:$0xff]
    %v1527 = vld [vmem:[#allocation10 + $0x78] sm:$0xff]
    %v1528 = vld [vmem:[%s12] sm:$0x3]
    %v1530 = vlaneseq
    %v1531 = vshrl.u32 %v1530, 7
    %v1532 = vsub.s32 0, %v1531
    %v1533 = vrot.slane %v1528, %v1532
    %v1534 = vlaneseq
    %v1535 = vshrl.u32 %v1534, 7
    %v1536 = vsub.s32 1, %v1535
    %v1537 = vrot.slane %v1528, %v1536
    %v1556 = vunpack.c.l.b16 %v1512
    %v1557 = vunpack.c.h.b16 %v1512
    %v1558 = vunpack.c.l.b16 %v1513
    %v1559 = vunpack.c.h.b16 %v1513
    %v1560 = vunpack.c.l.b16 %v1514
    %v1561 = vunpack.c.h.b16 %v1514
    %v1562 = vunpack.c.l.b16 %v1515
    %v1563 = vunpack.c.h.b16 %v1515
    %v1564 = vunpack.c.l.b16 %v1516
    %v1565 = vunpack.c.h.b16 %v1516
    %v1566 = vunpack.c.l.b16 %v1517
    %v1567 = vunpack.c.h.b16 %v1517
    %v1568 = vunpack.c.l.b16 %v1518
    %v1569 = vunpack.c.h.b16 %v1518
    %v1570 = vunpack.c.l.b16 %v1519
    %v1571 = vunpack.c.h.b16 %v1519
    %v1572 = vunpack.c.l.b16 %v1520
    %v1573 = vunpack.c.h.b16 %v1520
    %v1574 = vunpack.c.l.b16 %v1521
    %v1575 = vunpack.c.h.b16 %v1521
    %v1576 = vunpack.c.l.b16 %v1522
    %v1577 = vunpack.c.h.b16 %v1522
    %v1578 = vunpack.c.l.b16 %v1523
    %v1579 = vunpack.c.h.b16 %v1523
    %v1580 = vunpack.c.l.b16 %v1524
    %v1581 = vunpack.c.h.b16 %v1524
    %v1582 = vunpack.c.l.b16 %v1525
    %v1583 = vunpack.c.h.b16 %v1525
    %v1584 = vunpack.c.l.b16 %v1526
    %v1585 = vunpack.c.h.b16 %v1526
    %v1586 = vunpack.c.l.b16 %v1527
    %v1587 = vunpack.c.h.b16 %v1527
    %v1588 = vpack.c.b16 %v1558, %v1556
    %v1589 = vpack.c.b16 %v1559, %v1557
    %v1590 = vpack.c.b16 %v1562, %v1560
    %v1591 = vpack.c.b16 %v1563, %v1561
    %v1592 = vpack.c.b16 %v1566, %v1564
    %v1593 = vpack.c.b16 %v1567, %v1565
    %v1594 = vpack.c.b16 %v1570, %v1568
    %v1595 = vpack.c.b16 %v1571, %v1569
    %v1596 = vpack.c.b16 %v1574, %v1572
    %v1597 = vpack.c.b16 %v1575, %v1573
    %v1598 = vpack.c.b16 %v1578, %v1576
    %v1599 = vpack.c.b16 %v1579, %v1577
    %v1600 = vpack.c.b16 %v1582, %v1580
    %v1601 = vpack.c.b16 %v1583, %v1581
    %v1602 = vpack.c.b16 %v1586, %v1584
    %v1603 = vpack.c.b16 %v1587, %v1585
    %1620 = vmatprep.subr.bf16.mxu0 %v1589
    %1621 = vmatpush1.bf16.msra.mxu0 %v1588
    %1622 = vmatprep.subr.bf16.mxu0 %v1591
    %1623 = vmatpush1.bf16.msra.mxu0 %v1590
    %1624 = vmatprep.subr.bf16.mxu0 %v1593
    %1625 = vmatpush1.bf16.msra.mxu0 %v1592
    %1626 = vmatprep.subr.bf16.mxu0 %v1595
    %1627 = vmatpush1.bf16.msra.mxu0 %v1594
    %1628 = vmatprep.subr.bf16.mxu0 %v1597
    %1629 = vmatpush1.bf16.msra.mxu0 %v1596
    %1630 = vmatprep.subr.bf16.mxu0 %v1599
    %1631 = vmatpush1.bf16.msra.mxu0 %v1598
    %1632 = vmatprep.subr.bf16.mxu0 %v1601
    %1633 = vmatpush1.bf16.msra.mxu0 %v1600
    %1634 = vmatprep.subr.bf16.mxu0 %v1603
    %1635 = vmatpush1.bf16.msra.mxu0 %v1602
    %1636 = vmatprep.subr.bf16.mxu0 0
    %1637 = vmatpush1.bf16.msra.mxu0 0
    %1638 = vmatprep.subr.bf16.mxu0 0
    %1639 = vmatpush1.bf16.msra.mxu0 0
    %1640 = vmatprep.subr.bf16.mxu0 0
    %1641 = vmatpush1.bf16.msra.mxu0 0
    %1642 = vmatprep.subr.bf16.mxu0 0
    %1643 = vmatpush1.bf16.msra.mxu0 0
    %1644 = vmatprep.subr.bf16.mxu0 0
    %1645 = vmatpush1.bf16.msra.mxu0 0
    %1646 = vmatprep.subr.bf16.mxu0 0
    %1647 = vmatpush1.bf16.msra.mxu0 0
    %1648 = vmatprep.subr.bf16.mxu0 0
    %1649 = vmatpush1.bf16.msra.mxu0 0
    %1650 = vmatprep.subr.bf16.mxu0 0
    %1651 = vmatpush1.bf16.msra.mxu0 0
    %1652 = vmatprep.mubr.bf16.mxu0 0
    %1653 = vmatmul.mubr.bf16.gmra.mrb[0].mxu0 %v1511
    %v1654 = vpop.f32.mrb[0].mxu0
    %v1655 = vadd.f32 %v1533, %v1654
    %v1656 = vpop.f32.mrb[0].mxu0
    %v1657 = vadd.f32 %v1537, %v1656
    %v1658 = vpop.f32.mrb[0].mxu0
    %v1659 = vpop.f32.mrb[0].mxu0
    %1660 = vdwg.mxu0
    %v1661 = vtanh.pop %v1655
    %v1662 = vtanh.pop %v1657
    %v1663 = vpack.c.bf16 %v1661, %v1661
    %v1664 = vpack.c.bf16 %v1662, %v1662
    %v1665 = vld [vmem:[#allocation11] sm:$0xff]
    %v1666 = vld [vmem:[#allocation11 + $0x8] sm:$0xff]
    %v1667 = vld [vmem:[#allocation11 + $0x10] sm:$0xff]
    %v1668 = vld [vmem:[#allocation11 + $0x18] sm:$0xff]
    %v1669 = vld [vmem:[#allocation11 + $0x20] sm:$0xff]
    %v1670 = vld [vmem:[#allocation11 + $0x28] sm:$0xff]
    %v1671 = vld [vmem:[#allocation11 + $0x30] sm:$0xff]
    %v1672 = vld [vmem:[#allocation11 + $0x38] sm:$0xff]
    %v1673 = vld [vmem:[#allocation11 + $0x40] sm:$0xff]
    %v1674 = vld [vmem:[#allocation11 + $0x48] sm:$0xff]
    %v1675 = vld [vmem:[#allocation11 + $0x50] sm:$0xff]
    %v1676 = vld [vmem:[#allocation11 + $0x58] sm:$0xff]
    %v1677 = vld [vmem:[#allocation11 + $0x60] sm:$0xff]
    %v1678 = vld [vmem:[#allocation11 + $0x68] sm:$0xff]
    %v1679 = vld [vmem:[#allocation11 + $0x70] sm:$0xff]
    %v1680 = vld [vmem:[#allocation11 + $0x78] sm:$0xff]
    %v1681 = vld [vmem:[#allocation11 + $0x80] sm:$0xff]
    %v1682 = vld [vmem:[#allocation11 + $0x88] sm:$0xff]
    %v1683 = vld [vmem:[#allocation11 + $0x90] sm:$0xff]
    %v1684 = vld [vmem:[#allocation11 + $0x98] sm:$0xff]
    %v1685 = vld [vmem:[#allocation11 + $0xa0] sm:$0xff]
    %v1686 = vld [vmem:[#allocation11 + $0xa8] sm:$0xff]
    %v1687 = vld [vmem:[#allocation11 + $0xb0] sm:$0xff]
    %v1688 = vld [vmem:[#allocation11 + $0xb8] sm:$0xff]
    %v1689 = vld [vmem:[#allocation11 + $0xc0] sm:$0xff]
    %v1690 = vld [vmem:[#allocation11 + $0xc8] sm:$0xff]
    %v1691 = vld [vmem:[#allocation11 + $0xd0] sm:$0xff]
    %v1692 = vld [vmem:[#allocation11 + $0xd8] sm:$0xff]
    %v1693 = vld [vmem:[#allocation11 + $0xe0] sm:$0xff]
    %v1694 = vld [vmem:[#allocation11 + $0xe8] sm:$0xff]
    %v1695 = vld [vmem:[#allocation11 + $0xf0] sm:$0xff]
    %v1696 = vld [vmem:[#allocation11 + $0xf8] sm:$0xff]
    %v1697 = vld [vmem:[#allocation11 + $0x100] sm:$0xff]
    %v1698 = vld [vmem:[#allocation11 + $0x108] sm:$0xff]
    %v1699 = vld [vmem:[#allocation11 + $0x110] sm:$0xff]
    %v1700 = vld [vmem:[#allocation11 + $0x118] sm:$0xff]
    %v1701 = vld [vmem:[#allocation11 + $0x120] sm:$0xff]
    %v1702 = vld [vmem:[#allocation11 + $0x128] sm:$0xff]
    %v1703 = vld [vmem:[#allocation11 + $0x130] sm:$0xff]
    %v1704 = vld [vmem:[#allocation11 + $0x138] sm:$0xff]
    %v1705 = vld [vmem:[#allocation11 + $0x140] sm:$0xff]
    %v1706 = vld [vmem:[#allocation11 + $0x148] sm:$0xff]
    %v1707 = vld [vmem:[#allocation11 + $0x150] sm:$0xff]
    %v1708 = vld [vmem:[#allocation11 + $0x158] sm:$0xff]
    %v1709 = vld [vmem:[#allocation11 + $0x160] sm:$0xff]
    %v1710 = vld [vmem:[#allocation11 + $0x168] sm:$0xff]
    %v1711 = vld [vmem:[#allocation11 + $0x170] sm:$0xff]
    %v1712 = vld [vmem:[#allocation11 + $0x178] sm:$0xff]
    %v1713 = vld [vmem:[#allocation11 + $0x180] sm:$0xff]
    %v1714 = vld [vmem:[#allocation11 + $0x188] sm:$0xff]
    %v1715 = vld [vmem:[#allocation11 + $0x190] sm:$0xff]
    %v1716 = vld [vmem:[#allocation11 + $0x198] sm:$0xff]
    %v1717 = vld [vmem:[#allocation11 + $0x1a0] sm:$0xff]
    %v1718 = vld [vmem:[#allocation11 + $0x1a8] sm:$0xff]
    %v1719 = vld [vmem:[#allocation11 + $0x1b0] sm:$0xff]
    %v1720 = vld [vmem:[#allocation11 + $0x1b8] sm:$0xff]
    %v1721 = vld [vmem:[#allocation11 + $0x1c0] sm:$0xff]
    %v1722 = vld [vmem:[#allocation11 + $0x1c8] sm:$0xff]
    %v1723 = vld [vmem:[#allocation11 + $0x1d0] sm:$0xff]
    %v1724 = vld [vmem:[#allocation11 + $0x1d8] sm:$0xff]
    %v1725 = vld [vmem:[#allocation11 + $0x1e0] sm:$0xff]
    %v1726 = vld [vmem:[#allocation11 + $0x1e8] sm:$0xff]
    %v1727 = vld [vmem:[#allocation11 + $0x1f0] sm:$0xff]
    %v1728 = vld [vmem:[#allocation11 + $0x1f8] sm:$0xff]
    %v1729 = vld [vmem:[%s14] sm:$0xf]
    %v1731 = vlaneseq
    %v1732 = vshrl.u32 %v1731, 7
    %v1733 = vsub.s32 0, %v1732
    %v1734 = vrot.slane %v1729, %v1733
    %v1735 = vlaneseq
    %v1736 = vshrl.u32 %v1735, 7
    %v1737 = vsub.s32 1, %v1736
    %v1738 = vrot.slane %v1729, %v1737
    %v1739 = vlaneseq
    %v1740 = vshrl.u32 %v1739, 7
    %v1741 = vsub.s32 2, %v1740
    %v1742 = vrot.slane %v1729, %v1741
    %v1743 = vlaneseq
    %v1744 = vshrl.u32 %v1743, 7
    %v1745 = vsub.s32 3, %v1744
    %v1746 = vrot.slane %v1729, %v1745
    %v1815 = vunpack.c.l.b16 %v1665
    %v1816 = vunpack.c.h.b16 %v1665
    %v1817 = vunpack.c.l.b16 %v1666
    %v1818 = vunpack.c.h.b16 %v1666
    %v1819 = vunpack.c.l.b16 %v1667
    %v1820 = vunpack.c.h.b16 %v1667
    %v1821 = vunpack.c.l.b16 %v1668
    %v1822 = vunpack.c.h.b16 %v1668
    %v1823 = vunpack.c.l.b16 %v1669
    %v1824 = vunpack.c.h.b16 %v1669
    %v1825 = vunpack.c.l.b16 %v1670
    %v1826 = vunpack.c.h.b16 %v1670
    %v1827 = vunpack.c.l.b16 %v1671
    %v1828 = vunpack.c.h.b16 %v1671
    %v1829 = vunpack.c.l.b16 %v1672
    %v1830 = vunpack.c.h.b16 %v1672
    %v1831 = vunpack.c.l.b16 %v1673
    %v1832 = vunpack.c.h.b16 %v1673
    %v1833 = vunpack.c.l.b16 %v1674
    %v1834 = vunpack.c.h.b16 %v1674
    %v1835 = vunpack.c.l.b16 %v1675
    %v1836 = vunpack.c.h.b16 %v1675
    %v1837 = vunpack.c.l.b16 %v1676
    %v1838 = vunpack.c.h.b16 %v1676
    %v1839 = vunpack.c.l.b16 %v1677
    %v1840 = vunpack.c.h.b16 %v1677
    %v1841 = vunpack.c.l.b16 %v1678
    %v1842 = vunpack.c.h.b16 %v1678
    %v1843 = vunpack.c.l.b16 %v1679
    %v1844 = vunpack.c.h.b16 %v1679
    %v1845 = vunpack.c.l.b16 %v1680
    %v1846 = vunpack.c.h.b16 %v1680
    %v1847 = vunpack.c.l.b16 %v1681
    %v1848 = vunpack.c.h.b16 %v1681
    %v1849 = vunpack.c.l.b16 %v1682
    %v1850 = vunpack.c.h.b16 %v1682
    %v1851 = vunpack.c.l.b16 %v1683
    %v1852 = vunpack.c.h.b16 %v1683
    %v1853 = vunpack.c.l.b16 %v1684
    %v1854 = vunpack.c.h.b16 %v1684
    %v1855 = vunpack.c.l.b16 %v1685
    %v1856 = vunpack.c.h.b16 %v1685
    %v1857 = vunpack.c.l.b16 %v1686
    %v1858 = vunpack.c.h.b16 %v1686
    %v1859 = vunpack.c.l.b16 %v1687
    %v1860 = vunpack.c.h.b16 %v1687
    %v1861 = vunpack.c.l.b16 %v1688
    %v1862 = vunpack.c.h.b16 %v1688
    %v1863 = vunpack.c.l.b16 %v1689
    %v1864 = vunpack.c.h.b16 %v1689
    %v1865 = vunpack.c.l.b16 %v1690
    %v1866 = vunpack.c.h.b16 %v1690
    %v1867 = vunpack.c.l.b16 %v1691
    %v1868 = vunpack.c.h.b16 %v1691
    %v1869 = vunpack.c.l.b16 %v1692
    %v1870 = vunpack.c.h.b16 %v1692
    %v1871 = vunpack.c.l.b16 %v1693
    %v1872 = vunpack.c.h.b16 %v1693
    %v1873 = vunpack.c.l.b16 %v1694
    %v1874 = vunpack.c.h.b16 %v1694
    %v1875 = vunpack.c.l.b16 %v1695
    %v1876 = vunpack.c.h.b16 %v1695
    %v1877 = vunpack.c.l.b16 %v1696
    %v1878 = vunpack.c.h.b16 %v1696
    %v1879 = vunpack.c.l.b16 %v1697
    %v1880 = vunpack.c.h.b16 %v1697
    %v1881 = vunpack.c.l.b16 %v1698
    %v1882 = vunpack.c.h.b16 %v1698
    %v1883 = vunpack.c.l.b16 %v1699
    %v1884 = vunpack.c.h.b16 %v1699
    %v1885 = vunpack.c.l.b16 %v1700
    %v1886 = vunpack.c.h.b16 %v1700
    %v1887 = vunpack.c.l.b16 %v1701
    %v1888 = vunpack.c.h.b16 %v1701
    %v1889 = vunpack.c.l.b16 %v1702
    %v1890 = vunpack.c.h.b16 %v1702
    %v1891 = vunpack.c.l.b16 %v1703
    %v1892 = vunpack.c.h.b16 %v1703
    %v1893 = vunpack.c.l.b16 %v1704
    %v1894 = vunpack.c.h.b16 %v1704
    %v1895 = vunpack.c.l.b16 %v1705
    %v1896 = vunpack.c.h.b16 %v1705
    %v1897 = vunpack.c.l.b16 %v1706
    %v1898 = vunpack.c.h.b16 %v1706
    %v1899 = vunpack.c.l.b16 %v1707
    %v1900 = vunpack.c.h.b16 %v1707
    %v1901 = vunpack.c.l.b16 %v1708
    %v1902 = vunpack.c.h.b16 %v1708
    %v1903 = vunpack.c.l.b16 %v1709
    %v1904 = vunpack.c.h.b16 %v1709
    %v1905 = vunpack.c.l.b16 %v1710
    %v1906 = vunpack.c.h.b16 %v1710
    %v1907 = vunpack.c.l.b16 %v1711
    %v1908 = vunpack.c.h.b16 %v1711
    %v1909 = vunpack.c.l.b16 %v1712
    %v1910 = vunpack.c.h.b16 %v1712
    %v1911 = vunpack.c.l.b16 %v1713
    %v1912 = vunpack.c.h.b16 %v1713
    %v1913 = vunpack.c.l.b16 %v1714
    %v1914 = vunpack.c.h.b16 %v1714
    %v1915 = vunpack.c.l.b16 %v1715
    %v1916 = vunpack.c.h.b16 %v1715
    %v1917 = vunpack.c.l.b16 %v1716
    %v1918 = vunpack.c.h.b16 %v1716
    %v1919 = vunpack.c.l.b16 %v1717
    %v1920 = vunpack.c.h.b16 %v1717
    %v1921 = vunpack.c.l.b16 %v1718
    %v1922 = vunpack.c.h.b16 %v1718
    %v1923 = vunpack.c.l.b16 %v1719
    %v1924 = vunpack.c.h.b16 %v1719
    %v1925 = vunpack.c.l.b16 %v1720
    %v1926 = vunpack.c.h.b16 %v1720
    %v1927 = vunpack.c.l.b16 %v1721
    %v1928 = vunpack.c.h.b16 %v1721
    %v1929 = vunpack.c.l.b16 %v1722
    %v1930 = vunpack.c.h.b16 %v1722
    %v1931 = vunpack.c.l.b16 %v1723
    %v1932 = vunpack.c.h.b16 %v1723
    %v1933 = vunpack.c.l.b16 %v1724
    %v1934 = vunpack.c.h.b16 %v1724
    %v1935 = vunpack.c.l.b16 %v1725
    %v1936 = vunpack.c.h.b16 %v1725
    %v1937 = vunpack.c.l.b16 %v1726
    %v1938 = vunpack.c.h.b16 %v1726
    %v1939 = vunpack.c.l.b16 %v1727
    %v1940 = vunpack.c.h.b16 %v1727
    %v1941 = vunpack.c.l.b16 %v1728
    %v1942 = vunpack.c.h.b16 %v1728
    %v1943 = vpack.c.b16 %v1819, %v1815
    %v1944 = vpack.c.b16 %v1820, %v1816
    %v1945 = vpack.c.b16 %v1821, %v1817
    %v1946 = vpack.c.b16 %v1822, %v1818
    %v1947 = vpack.c.b16 %v1827, %v1823
    %v1948 = vpack.c.b16 %v1828, %v1824
    %v1949 = vpack.c.b16 %v1829, %v1825
    %v1950 = vpack.c.b16 %v1830, %v1826
    %v1951 = vpack.c.b16 %v1835, %v1831
    %v1952 = vpack.c.b16 %v1836, %v1832
    %v1953 = vpack.c.b16 %v1837, %v1833
    %v1954 = vpack.c.b16 %v1838, %v1834
    %v1955 = vpack.c.b16 %v1843, %v1839
    %v1956 = vpack.c.b16 %v1844, %v1840
    %v1957 = vpack.c.b16 %v1845, %v1841
    %v1958 = vpack.c.b16 %v1846, %v1842
    %v1959 = vpack.c.b16 %v1851, %v1847
    %v1960 = vpack.c.b16 %v1852, %v1848
    %v1961 = vpack.c.b16 %v1853, %v1849
    %v1962 = vpack.c.b16 %v1854, %v1850
    %v1963 = vpack.c.b16 %v1859, %v1855
    %v1964 = vpack.c.b16 %v1860, %v1856
    %v1965 = vpack.c.b16 %v1861, %v1857
    %v1966 = vpack.c.b16 %v1862, %v1858
    %v1967 = vpack.c.b16 %v1867, %v1863
    %v1968 = vpack.c.b16 %v1868, %v1864
    %v1969 = vpack.c.b16 %v1869, %v1865
    %v1970 = vpack.c.b16 %v1870, %v1866
    %v1971 = vpack.c.b16 %v1875, %v1871
    %v1972 = vpack.c.b16 %v1876, %v1872
    %v1973 = vpack.c.b16 %v1877, %v1873
    %v1974 = vpack.c.b16 %v1878, %v1874
    %v1975 = vpack.c.b16 %v1883, %v1879
    %v1976 = vpack.c.b16 %v1884, %v1880
    %v1977 = vpack.c.b16 %v1885, %v1881
    %v1978 = vpack.c.b16 %v1886, %v1882
    %v1979 = vpack.c.b16 %v1891, %v1887
    %v1980 = vpack.c.b16 %v1892, %v1888
    %v1981 = vpack.c.b16 %v1893, %v1889
    %v1982 = vpack.c.b16 %v1894, %v1890
    %v1983 = vpack.c.b16 %v1899, %v1895
    %v1984 = vpack.c.b16 %v1900, %v1896
    %v1985 = vpack.c.b16 %v1901, %v1897
    %v1986 = vpack.c.b16 %v1902, %v1898
    %v1987 = vpack.c.b16 %v1907, %v1903
    %v1988 = vpack.c.b16 %v1908, %v1904
    %v1989 = vpack.c.b16 %v1909, %v1905
    %v1990 = vpack.c.b16 %v1910, %v1906
    %v1991 = vpack.c.b16 %v1915, %v1911
    %v1992 = vpack.c.b16 %v1916, %v1912
    %v1993 = vpack.c.b16 %v1917, %v1913
    %v1994 = vpack.c.b16 %v1918, %v1914
    %v1995 = vpack.c.b16 %v1923, %v1919
    %v1996 = vpack.c.b16 %v1924, %v1920
    %v1997 = vpack.c.b16 %v1925, %v1921
    %v1998 = vpack.c.b16 %v1926, %v1922
    %v1999 = vpack.c.b16 %v1931, %v1927
    %v2000 = vpack.c.b16 %v1932, %v1928
    %v2001 = vpack.c.b16 %v1933, %v1929
    %v2002 = vpack.c.b16 %v1934, %v1930
    %v2003 = vpack.c.b16 %v1939, %v1935
    %v2004 = vpack.c.b16 %v1940, %v1936
    %v2005 = vpack.c.b16 %v1941, %v1937
    %v2006 = vpack.c.b16 %v1942, %v1938
    %2071 = vmatprep.subr.bf16.mxu0 %v1944
    %2072 = vmatpush1.bf16.msra.mxu0 %v1943
    %2073 = vmatprep.subr.bf16.mxu0 %v1948
    %2074 = vmatpush1.bf16.msra.mxu0 %v1947
    %2075 = vmatprep.subr.bf16.mxu0 %v1952
    %2076 = vmatpush1.bf16.msra.mxu0 %v1951
    %2077 = vmatprep.subr.bf16.mxu0 %v1956
    %2078 = vmatpush1.bf16.msra.mxu0 %v1955
    %2079 = vmatprep.subr.bf16.mxu0 %v1960
    %2080 = vmatpush1.bf16.msra.mxu0 %v1959
    %2081 = vmatprep.subr.bf16.mxu0 %v1964
    %2082 = vmatpush1.bf16.msra.mxu0 %v1963
    %2083 = vmatprep.subr.bf16.mxu0 %v1968
    %2084 = vmatpush1.bf16.msra.mxu0 %v1967
    %2085 = vmatprep.subr.bf16.mxu0 %v1972
    %2086 = vmatpush1.bf16.msra.mxu0 %v1971
    %2087 = vmatprep.subr.bf16.mxu0 %v1976
    %2088 = vmatpush1.bf16.msra.mxu0 %v1975
    %2089 = vmatprep.subr.bf16.mxu0 %v1980
    %2090 = vmatpush1.bf16.msra.mxu0 %v1979
    %2091 = vmatprep.subr.bf16.mxu0 %v1984
    %2092 = vmatpush1.bf16.msra.mxu0 %v1983
    %2093 = vmatprep.subr.bf16.mxu0 %v1988
    %2094 = vmatpush1.bf16.msra.mxu0 %v1987
    %2095 = vmatprep.subr.bf16.mxu0 %v1992
    %2096 = vmatpush1.bf16.msra.mxu0 %v1991
    %2097 = vmatprep.subr.bf16.mxu0 %v1996
    %2098 = vmatpush1.bf16.msra.mxu0 %v1995
    %2099 = vmatprep.subr.bf16.mxu0 %v2000
    %2100 = vmatpush1.bf16.msra.mxu0 %v1999
    %2101 = vmatprep.subr.bf16.mxu0 %v2004
    %2102 = vmatpush1.bf16.msra.mxu0 %v2003
    %2103 = vmatprep.mubr.bf16.mxu0 %v1664
    %2104 = vmatmul.mubr.bf16.gmra.mrb[0].mxu0 %v1663
    %v2105 = vpop.f32.mrb[0].mxu0
    %v2106 = vadd.f32 %v1734, %v2105
    %v2107 = vpop.f32.mrb[0].mxu0
    %v2108 = vadd.f32 %v1738, %v2107
    %v2109 = vpop.f32.mrb[0].mxu0
    %v2110 = vpop.f32.mrb[0].mxu0
    %2111 = vdwg.mxu0
    %2112 = vmatprep.subr.bf16.mxu0 %v1946
    %2113 = vmatpush1.bf16.msra.mxu0 %v1945
    %2114 = vmatprep.subr.bf16.mxu0 %v1950
    %2115 = vmatpush1.bf16.msra.mxu0 %v1949
    %2116 = vmatprep.subr.bf16.mxu0 %v1954
    %2117 = vmatpush1.bf16.msra.mxu0 %v1953
    %2118 = vmatprep.subr.bf16.mxu0 %v1958
    %2119 = vmatpush1.bf16.msra.mxu0 %v1957
    %2120 = vmatprep.subr.bf16.mxu0 %v1962
    %2121 = vmatpush1.bf16.msra.mxu0 %v1961
    %2122 = vmatprep.subr.bf16.mxu0 %v1966
    %2123 = vmatpush1.bf16.msra.mxu0 %v1965
    %2124 = vmatprep.subr.bf16.mxu0 %v1970
    %2125 = vmatpush1.bf16.msra.mxu0 %v1969
    %2126 = vmatprep.subr.bf16.mxu0 %v1974
    %2127 = vmatpush1.bf16.msra.mxu0 %v1973
    %2128 = vmatprep.subr.bf16.mxu0 %v1978
    %2129 = vmatpush1.bf16.msra.mxu0 %v1977
    %2130 = vmatprep.subr.bf16.mxu0 %v1982
    %2131 = vmatpush1.bf16.msra.mxu0 %v1981
    %2132 = vmatprep.subr.bf16.mxu0 %v1986
    %2133 = vmatpush1.bf16.msra.mxu0 %v1985
    %2134 = vmatprep.subr.bf16.mxu0 %v1990
    %2135 = vmatpush1.bf16.msra.mxu0 %v1989
    %2136 = vmatprep.subr.bf16.mxu0 %v1994
    %2137 = vmatpush1.bf16.msra.mxu0 %v1993
    %2138 = vmatprep.subr.bf16.mxu0 %v1998
    %2139 = vmatpush1.bf16.msra.mxu0 %v1997
    %2140 = vmatprep.subr.bf16.mxu0 %v2002
    %2141 = vmatpush1.bf16.msra.mxu0 %v2001
    %2142 = vmatprep.subr.bf16.mxu0 %v2006
    %2143 = vmatpush1.bf16.msra.mxu0 %v2005
    %2144 = vmatprep.mubr.bf16.mxu0 %v1664
    %2145 = vmatmul.mubr.bf16.gmra.mrb[0].mxu0 %v1663
    %v2146 = vpop.f32.mrb[0].mxu0
    %v2147 = vadd.f32 %v1742, %v2146
    %v2148 = vpop.f32.mrb[0].mxu0
    %v2149 = vadd.f32 %v1746, %v2148
    %v2150 = vpop.f32.mrb[0].mxu0
    %v2151 = vpop.f32.mrb[0].mxu0
    %2152 = vdwg.mxu0
    %v2153 = vtanh.pop %v2106
    %v2154 = vtanh.pop %v2108
    %v2155 = vtanh.pop %v2147
    %v2156 = vtanh.pop %v2149
    %v2157 = vpack.c.bf16 %v2153, %v2153
    %v2158 = vpack.c.bf16 %v2154, %v2154
    %v2159 = vpack.c.bf16 %v2155, %v2155
    %v2160 = vpack.c.bf16 %v2156, %v2156
    %v2161 = vld [vmem:[#allocation13] sm:$0xff]
    %v2162 = vld [vmem:[#allocation13 + $0x8] sm:$0xff]
    %v2163 = vld [vmem:[#allocation13 + $0x10] sm:$0xff]
    %v2164 = vld [vmem:[#allocation13 + $0x18] sm:$0xff]
    %v2165 = vld [vmem:[#allocation13 + $0x20] sm:$0xff]
    %v2166 = vld [vmem:[#allocation13 + $0x28] sm:$0xff]
    %v2167 = vld [vmem:[#allocation13 + $0x30] sm:$0xff]
    %v2168 = vld [vmem:[#allocation13 + $0x38] sm:$0xff]
    %v2169 = vld [vmem:[#allocation13 + $0x40] sm:$0xff]
    %v2170 = vld [vmem:[#allocation13 + $0x48] sm:$0xff]
    %v2171 = vld [vmem:[#allocation13 + $0x50] sm:$0xff]
    %v2172 = vld [vmem:[#allocation13 + $0x58] sm:$0xff]
    %v2173 = vld [vmem:[#allocation13 + $0x60] sm:$0xff]
    %v2174 = vld [vmem:[#allocation13 + $0x68] sm:$0xff]
    %v2175 = vld [vmem:[#allocation13 + $0x70] sm:$0xff]
    %v2176 = vld [vmem:[#allocation13 + $0x78] sm:$0xff]
    %v2177 = vld [vmem:[#allocation13 + $0x80] sm:$0xff]
    %v2178 = vld [vmem:[#allocation13 + $0x88] sm:$0xff]
    %v2179 = vld [vmem:[#allocation13 + $0x90] sm:$0xff]
    %v2180 = vld [vmem:[#allocation13 + $0x98] sm:$0xff]
    %v2181 = vld [vmem:[#allocation13 + $0xa0] sm:$0xff]
    %v2182 = vld [vmem:[#allocation13 + $0xa8] sm:$0xff]
    %v2183 = vld [vmem:[#allocation13 + $0xb0] sm:$0xff]
    %v2184 = vld [vmem:[#allocation13 + $0xb8] sm:$0xff]
    %v2185 = vld [vmem:[#allocation13 + $0xc0] sm:$0xff]
    %v2186 = vld [vmem:[#allocation13 + $0xc8] sm:$0xff]
    %v2187 = vld [vmem:[#allocation13 + $0xd0] sm:$0xff]
    %v2188 = vld [vmem:[#allocation13 + $0xd8] sm:$0xff]
    %v2189 = vld [vmem:[#allocation13 + $0xe0] sm:$0xff]
    %v2190 = vld [vmem:[#allocation13 + $0xe8] sm:$0xff]
    %v2191 = vld [vmem:[#allocation13 + $0xf0] sm:$0xff]
    %v2192 = vld [vmem:[#allocation13 + $0xf8] sm:$0xff]
    %v2193 = vld [vmem:[#allocation13 + $0x100] sm:$0xff]
    %v2194 = vld [vmem:[#allocation13 + $0x108] sm:$0xff]
    %v2195 = vld [vmem:[#allocation13 + $0x110] sm:$0xff]
    %v2196 = vld [vmem:[#allocation13 + $0x118] sm:$0xff]
    %v2197 = vld [vmem:[#allocation13 + $0x120] sm:$0xff]
    %v2198 = vld [vmem:[#allocation13 + $0x128] sm:$0xff]
    %v2199 = vld [vmem:[#allocation13 + $0x130] sm:$0xff]
    %v2200 = vld [vmem:[#allocation13 + $0x138] sm:$0xff]
    %v2201 = vld [vmem:[#allocation13 + $0x140] sm:$0xff]
    %v2202 = vld [vmem:[#allocation13 + $0x148] sm:$0xff]
    %v2203 = vld [vmem:[#allocation13 + $0x150] sm:$0xff]
    %v2204 = vld [vmem:[#allocation13 + $0x158] sm:$0xff]
    %v2205 = vld [vmem:[#allocation13 + $0x160] sm:$0xff]
    %v2206 = vld [vmem:[#allocation13 + $0x168] sm:$0xff]
    %v2207 = vld [vmem:[#allocation13 + $0x170] sm:$0xff]
    %v2208 = vld [vmem:[#allocation13 + $0x178] sm:$0xff]
    %v2209 = vld [vmem:[#allocation13 + $0x180] sm:$0xff]
    %v2210 = vld [vmem:[#allocation13 + $0x188] sm:$0xff]
    %v2211 = vld [vmem:[#allocation13 + $0x190] sm:$0xff]
    %v2212 = vld [vmem:[#allocation13 + $0x198] sm:$0xff]
    %v2213 = vld [vmem:[#allocation13 + $0x1a0] sm:$0xff]
    %v2214 = vld [vmem:[#allocation13 + $0x1a8] sm:$0xff]
    %v2215 = vld [vmem:[#allocation13 + $0x1b0] sm:$0xff]
    %v2216 = vld [vmem:[#allocation13 + $0x1b8] sm:$0xff]
    %v2217 = vld [vmem:[#allocation13 + $0x1c0] sm:$0xff]
    %v2218 = vld [vmem:[#allocation13 + $0x1c8] sm:$0xff]
    %v2219 = vld [vmem:[#allocation13 + $0x1d0] sm:$0xff]
    %v2220 = vld [vmem:[#allocation13 + $0x1d8] sm:$0xff]
    %v2221 = vld [vmem:[#allocation13 + $0x1e0] sm:$0xff]
    %v2222 = vld [vmem:[#allocation13 + $0x1e8] sm:$0xff]
    %v2223 = vld [vmem:[#allocation13 + $0x1f0] sm:$0xff]
    %v2224 = vld [vmem:[#allocation13 + $0x1f8] sm:$0xff]
    %v2225 = vld [vmem:[%s16] sm:$0x3]
    %v2227 = vlaneseq
    %v2228 = vshrl.u32 %v2227, 7
    %v2229 = vsub.s32 0, %v2228
    %v2230 = vrot.slane %v2225, %v2229
    %v2231 = vlaneseq
    %v2232 = vshrl.u32 %v2231, 7
    %v2233 = vsub.s32 1, %v2232
    %v2234 = vrot.slane %v2225, %v2233
    %v2301 = vunpack.c.l.b16 %v2161
    %v2302 = vunpack.c.h.b16 %v2161
    %v2303 = vunpack.c.l.b16 %v2162
    %v2304 = vunpack.c.h.b16 %v2162
    %v2305 = vunpack.c.l.b16 %v2163
    %v2306 = vunpack.c.h.b16 %v2163
    %v2307 = vunpack.c.l.b16 %v2164
    %v2308 = vunpack.c.h.b16 %v2164
    %v2309 = vunpack.c.l.b16 %v2165
    %v2310 = vunpack.c.h.b16 %v2165
    %v2311 = vunpack.c.l.b16 %v2166
    %v2312 = vunpack.c.h.b16 %v2166
    %v2313 = vunpack.c.l.b16 %v2167
    %v2314 = vunpack.c.h.b16 %v2167
    %v2315 = vunpack.c.l.b16 %v2168
    %v2316 = vunpack.c.h.b16 %v2168
    %v2317 = vunpack.c.l.b16 %v2169
    %v2318 = vunpack.c.h.b16 %v2169
    %v2319 = vunpack.c.l.b16 %v2170
    %v2320 = vunpack.c.h.b16 %v2170
    %v2321 = vunpack.c.l.b16 %v2171
    %v2322 = vunpack.c.h.b16 %v2171
    %v2323 = vunpack.c.l.b16 %v2172
    %v2324 = vunpack.c.h.b16 %v2172
    %v2325 = vunpack.c.l.b16 %v2173
    %v2326 = vunpack.c.h.b16 %v2173
    %v2327 = vunpack.c.l.b16 %v2174
    %v2328 = vunpack.c.h.b16 %v2174
    %v2329 = vunpack.c.l.b16 %v2175
    %v2330 = vunpack.c.h.b16 %v2175
    %v2331 = vunpack.c.l.b16 %v2176
    %v2332 = vunpack.c.h.b16 %v2176
    %v2333 = vunpack.c.l.b16 %v2177
    %v2334 = vunpack.c.h.b16 %v2177
    %v2335 = vunpack.c.l.b16 %v2178
    %v2336 = vunpack.c.h.b16 %v2178
    %v2337 = vunpack.c.l.b16 %v2179
    %v2338 = vunpack.c.h.b16 %v2179
    %v2339 = vunpack.c.l.b16 %v2180
    %v2340 = vunpack.c.h.b16 %v2180
    %v2341 = vunpack.c.l.b16 %v2181
    %v2342 = vunpack.c.h.b16 %v2181
    %v2343 = vunpack.c.l.b16 %v2182
    %v2344 = vunpack.c.h.b16 %v2182
    %v2345 = vunpack.c.l.b16 %v2183
    %v2346 = vunpack.c.h.b16 %v2183
    %v2347 = vunpack.c.l.b16 %v2184
    %v2348 = vunpack.c.h.b16 %v2184
    %v2349 = vunpack.c.l.b16 %v2185
    %v2350 = vunpack.c.h.b16 %v2185
    %v2351 = vunpack.c.l.b16 %v2186
    %v2352 = vunpack.c.h.b16 %v2186
    %v2353 = vunpack.c.l.b16 %v2187
    %v2354 = vunpack.c.h.b16 %v2187
    %v2355 = vunpack.c.l.b16 %v2188
    %v2356 = vunpack.c.h.b16 %v2188
    %v2357 = vunpack.c.l.b16 %v2189
    %v2358 = vunpack.c.h.b16 %v2189
    %v2359 = vunpack.c.l.b16 %v2190
    %v2360 = vunpack.c.h.b16 %v2190
    %v2361 = vunpack.c.l.b16 %v2191
    %v2362 = vunpack.c.h.b16 %v2191
    %v2363 = vunpack.c.l.b16 %v2192
    %v2364 = vunpack.c.h.b16 %v2192
    %v2365 = vunpack.c.l.b16 %v2193
    %v2366 = vunpack.c.h.b16 %v2193
    %v2367 = vunpack.c.l.b16 %v2194
    %v2368 = vunpack.c.h.b16 %v2194
    %v2369 = vunpack.c.l.b16 %v2195
    %v2370 = vunpack.c.h.b16 %v2195
    %v2371 = vunpack.c.l.b16 %v2196
    %v2372 = vunpack.c.h.b16 %v2196
    %v2373 = vunpack.c.l.b16 %v2197
    %v2374 = vunpack.c.h.b16 %v2197
    %v2375 = vunpack.c.l.b16 %v2198
    %v2376 = vunpack.c.h.b16 %v2198
    %v2377 = vunpack.c.l.b16 %v2199
    %v2378 = vunpack.c.h.b16 %v2199
    %v2379 = vunpack.c.l.b16 %v2200
    %v2380 = vunpack.c.h.b16 %v2200
    %v2381 = vunpack.c.l.b16 %v2201
    %v2382 = vunpack.c.h.b16 %v2201
    %v2383 = vunpack.c.l.b16 %v2202
    %v2384 = vunpack.c.h.b16 %v2202
    %v2385 = vunpack.c.l.b16 %v2203
    %v2386 = vunpack.c.h.b16 %v2203
    %v2387 = vunpack.c.l.b16 %v2204
    %v2388 = vunpack.c.h.b16 %v2204
    %v2389 = vunpack.c.l.b16 %v2205
    %v2390 = vunpack.c.h.b16 %v2205
    %v2391 = vunpack.c.l.b16 %v2206
    %v2392 = vunpack.c.h.b16 %v2206
    %v2393 = vunpack.c.l.b16 %v2207
    %v2394 = vunpack.c.h.b16 %v2207
    %v2395 = vunpack.c.l.b16 %v2208
    %v2396 = vunpack.c.h.b16 %v2208
    %v2397 = vunpack.c.l.b16 %v2209
    %v2398 = vunpack.c.h.b16 %v2209
    %v2399 = vunpack.c.l.b16 %v2210
    %v2400 = vunpack.c.h.b16 %v2210
    %v2401 = vunpack.c.l.b16 %v2211
    %v2402 = vunpack.c.h.b16 %v2211
    %v2403 = vunpack.c.l.b16 %v2212
    %v2404 = vunpack.c.h.b16 %v2212
    %v2405 = vunpack.c.l.b16 %v2213
    %v2406 = vunpack.c.h.b16 %v2213
    %v2407 = vunpack.c.l.b16 %v2214
    %v2408 = vunpack.c.h.b16 %v2214
    %v2409 = vunpack.c.l.b16 %v2215
    %v2410 = vunpack.c.h.b16 %v2215
    %v2411 = vunpack.c.l.b16 %v2216
    %v2412 = vunpack.c.h.b16 %v2216
    %v2413 = vunpack.c.l.b16 %v2217
    %v2414 = vunpack.c.h.b16 %v2217
    %v2415 = vunpack.c.l.b16 %v2218
    %v2416 = vunpack.c.h.b16 %v2218
    %v2417 = vunpack.c.l.b16 %v2219
    %v2418 = vunpack.c.h.b16 %v2219
    %v2419 = vunpack.c.l.b16 %v2220
    %v2420 = vunpack.c.h.b16 %v2220
    %v2421 = vunpack.c.l.b16 %v2221
    %v2422 = vunpack.c.h.b16 %v2221
    %v2423 = vunpack.c.l.b16 %v2222
    %v2424 = vunpack.c.h.b16 %v2222
    %v2425 = vunpack.c.l.b16 %v2223
    %v2426 = vunpack.c.h.b16 %v2223
    %v2427 = vunpack.c.l.b16 %v2224
    %v2428 = vunpack.c.h.b16 %v2224
    %v2429 = vpack.c.b16 %v2303, %v2301
    %v2430 = vpack.c.b16 %v2304, %v2302
    %v2431 = vpack.c.b16 %v2307, %v2305
    %v2432 = vpack.c.b16 %v2308, %v2306
    %v2433 = vpack.c.b16 %v2311, %v2309
    %v2434 = vpack.c.b16 %v2312, %v2310
    %v2435 = vpack.c.b16 %v2315, %v2313
    %v2436 = vpack.c.b16 %v2316, %v2314
    %v2437 = vpack.c.b16 %v2319, %v2317
    %v2438 = vpack.c.b16 %v2320, %v2318
    %v2439 = vpack.c.b16 %v2323, %v2321
    %v2440 = vpack.c.b16 %v2324, %v2322
    %v2441 = vpack.c.b16 %v2327, %v2325
    %v2442 = vpack.c.b16 %v2328, %v2326
    %v2443 = vpack.c.b16 %v2331, %v2329
    %v2444 = vpack.c.b16 %v2332, %v2330
    %v2445 = vpack.c.b16 %v2335, %v2333
    %v2446 = vpack.c.b16 %v2336, %v2334
    %v2447 = vpack.c.b16 %v2339, %v2337
    %v2448 = vpack.c.b16 %v2340, %v2338
    %v2449 = vpack.c.b16 %v2343, %v2341
    %v2450 = vpack.c.b16 %v2344, %v2342
    %v2451 = vpack.c.b16 %v2347, %v2345
    %v2452 = vpack.c.b16 %v2348, %v2346
    %v2453 = vpack.c.b16 %v2351, %v2349
    %v2454 = vpack.c.b16 %v2352, %v2350
    %v2455 = vpack.c.b16 %v2355, %v2353
    %v2456 = vpack.c.b16 %v2356, %v2354
    %v2457 = vpack.c.b16 %v2359, %v2357
    %v2458 = vpack.c.b16 %v2360, %v2358
    %v2459 = vpack.c.b16 %v2363, %v2361
    %v2460 = vpack.c.b16 %v2364, %v2362
    %v2461 = vpack.c.b16 %v2367, %v2365
    %v2462 = vpack.c.b16 %v2368, %v2366
    %v2463 = vpack.c.b16 %v2371, %v2369
    %v2464 = vpack.c.b16 %v2372, %v2370
    %v2465 = vpack.c.b16 %v2375, %v2373
    %v2466 = vpack.c.b16 %v2376, %v2374
    %v2467 = vpack.c.b16 %v2379, %v2377
    %v2468 = vpack.c.b16 %v2380, %v2378
    %v2469 = vpack.c.b16 %v2383, %v2381
    %v2470 = vpack.c.b16 %v2384, %v2382
    %v2471 = vpack.c.b16 %v2387, %v2385
    %v2472 = vpack.c.b16 %v2388, %v2386
    %v2473 = vpack.c.b16 %v2391, %v2389
    %v2474 = vpack.c.b16 %v2392, %v2390
    %v2475 = vpack.c.b16 %v2395, %v2393
    %v2476 = vpack.c.b16 %v2396, %v2394
    %v2477 = vpack.c.b16 %v2399, %v2397
    %v2478 = vpack.c.b16 %v2400, %v2398
    %v2479 = vpack.c.b16 %v2403, %v2401
    %v2480 = vpack.c.b16 %v2404, %v2402
    %v2481 = vpack.c.b16 %v2407, %v2405
    %v2482 = vpack.c.b16 %v2408, %v2406
    %v2483 = vpack.c.b16 %v2411, %v2409
    %v2484 = vpack.c.b16 %v2412, %v2410
    %v2485 = vpack.c.b16 %v2415, %v2413
    %v2486 = vpack.c.b16 %v2416, %v2414
    %v2487 = vpack.c.b16 %v2419, %v2417
    %v2488 = vpack.c.b16 %v2420, %v2418
    %v2489 = vpack.c.b16 %v2423, %v2421
    %v2490 = vpack.c.b16 %v2424, %v2422
    %v2491 = vpack.c.b16 %v2427, %v2425
    %v2492 = vpack.c.b16 %v2428, %v2426
    %2557 = vmatprep.subr.bf16.mxu0 %v2430
    %2558 = vmatpush1.bf16.msra.mxu0 %v2429
    %2559 = vmatprep.subr.bf16.mxu0 %v2432
    %2560 = vmatpush1.bf16.msra.mxu0 %v2431
    %2561 = vmatprep.subr.bf16.mxu0 %v2434
    %2562 = vmatpush1.bf16.msra.mxu0 %v2433
    %2563 = vmatprep.subr.bf16.mxu0 %v2436
    %2564 = vmatpush1.bf16.msra.mxu0 %v2435
    %2565 = vmatprep.subr.bf16.mxu0 %v2438
    %2566 = vmatpush1.bf16.msra.mxu0 %v2437
    %2567 = vmatprep.subr.bf16.mxu0 %v2440
    %2568 = vmatpush1.bf16.msra.mxu0 %v2439
    %2569 = vmatprep.subr.bf16.mxu0 %v2442
    %2570 = vmatpush1.bf16.msra.mxu0 %v2441
    %2571 = vmatprep.subr.bf16.mxu0 %v2444
    %2572 = vmatpush1.bf16.msra.mxu0 %v2443
    %2573 = vmatprep.subr.bf16.mxu0 %v2446
    %2574 = vmatpush1.bf16.msra.mxu0 %v2445
    %2575 = vmatprep.subr.bf16.mxu0 %v2448
    %2576 = vmatpush1.bf16.msra.mxu0 %v2447
    %2577 = vmatprep.subr.bf16.mxu0 %v2450
    %2578 = vmatpush1.bf16.msra.mxu0 %v2449
    %2579 = vmatprep.subr.bf16.mxu0 %v2452
    %2580 = vmatpush1.bf16.msra.mxu0 %v2451
    %2581 = vmatprep.subr.bf16.mxu0 %v2454
    %2582 = vmatpush1.bf16.msra.mxu0 %v2453
    %2583 = vmatprep.subr.bf16.mxu0 %v2456
    %2584 = vmatpush1.bf16.msra.mxu0 %v2455
    %2585 = vmatprep.subr.bf16.mxu0 %v2458
    %2586 = vmatpush1.bf16.msra.mxu0 %v2457
    %2587 = vmatprep.subr.bf16.mxu0 %v2460
    %2588 = vmatpush1.bf16.msra.mxu0 %v2459
    %2589 = vmatprep.mubr.bf16.mxu0 %v2158
    %2590 = vmatmul.mubr.bf16.gmra.mrb[0].mxu0 %v2157
    %v2591 = vpop.f32.mrb[0].mxu0
    %v2592 = vadd.f32 %v2230, %v2591
    %v2593 = vpop.f32.mrb[0].mxu0
    %v2594 = vadd.f32 %v2234, %v2593
    %v2595 = vpop.f32.mrb[0].mxu0
    %v2596 = vpop.f32.mrb[0].mxu0
    %2597 = vdwg.mxu0
    %2598 = vmatprep.subr.bf16.mxu0 %v2462
    %2599 = vmatpush1.bf16.msra.mxu0 %v2461
    %2600 = vmatprep.subr.bf16.mxu0 %v2464
    %2601 = vmatpush1.bf16.msra.mxu0 %v2463
    %2602 = vmatprep.subr.bf16.mxu0 %v2466
    %2603 = vmatpush1.bf16.msra.mxu0 %v2465
    %2604 = vmatprep.subr.bf16.mxu0 %v2468
    %2605 = vmatpush1.bf16.msra.mxu0 %v2467
    %2606 = vmatprep.subr.bf16.mxu0 %v2470
    %2607 = vmatpush1.bf16.msra.mxu0 %v2469
    %2608 = vmatprep.subr.bf16.mxu0 %v2472
    %2609 = vmatpush1.bf16.msra.mxu0 %v2471
    %2610 = vmatprep.subr.bf16.mxu0 %v2474
    %2611 = vmatpush1.bf16.msra.mxu0 %v2473
    %2612 = vmatprep.subr.bf16.mxu0 %v2476
    %2613 = vmatpush1.bf16.msra.mxu0 %v2475
    %2614 = vmatprep.subr.bf16.mxu0 %v2478
    %2615 = vmatpush1.bf16.msra.mxu0 %v2477
    %2616 = vmatprep.subr.bf16.mxu0 %v2480
    %2617 = vmatpush1.bf16.msra.mxu0 %v2479
    %2618 = vmatprep.subr.bf16.mxu0 %v2482
    %2619 = vmatpush1.bf16.msra.mxu0 %v2481
    %2620 = vmatprep.subr.bf16.mxu0 %v2484
    %2621 = vmatpush1.bf16.msra.mxu0 %v2483
    %2622 = vmatprep.subr.bf16.mxu0 %v2486
    %2623 = vmatpush1.bf16.msra.mxu0 %v2485
    %2624 = vmatprep.subr.bf16.mxu0 %v2488
    %2625 = vmatpush1.bf16.msra.mxu0 %v2487
    %2626 = vmatprep.subr.bf16.mxu0 %v2490
    %2627 = vmatpush1.bf16.msra.mxu0 %v2489
    %2628 = vmatprep.subr.bf16.mxu0 %v2492
    %2629 = vmatpush1.bf16.msra.mxu0 %v2491
    %2630 = vmatprep.mubr.bf16.mxu0 %v2160
    %2631 = vmatmul.mubr.bf16.gmra.mrb[0].mxu0 %v2159
    %v2632 = vpop.f32.mrb[0].mxu0
    %v2633 = vadd.f32 %v2592, %v2632
    %v2634 = vpop.f32.mrb[0].mxu0
    %v2635 = vadd.f32 %v2594, %v2634
    %v2636 = vpop.f32.mrb[0].mxu0
    %v2637 = vpop.f32.mrb[0].mxu0
    %2638 = vdwg.mxu0
    %v2639 = vtanh.pop %v2633
    %v2640 = vtanh.pop %v2635
    %v2641 = vpack.c.bf16 %v2639, %v2639
    %v2642 = vpack.c.bf16 %v2640, %v2640
    %v2643 = vld [vmem:[#allocation14] sm:$0xf]
    %v2644 = vld [vmem:[#allocation14 + $0x4] sm:$0xf]
    %v2645 = vld [vmem:[#allocation14 + $0x8] sm:$0xf]
    %v2646 = vld [vmem:[#allocation14 + $0xc] sm:$0xf]
    %v2647 = vld [vmem:[#allocation14 + $0x10] sm:$0xf]
    %v2648 = vld [vmem:[#allocation14 + $0x14] sm:$0xf]
    %v2649 = vld [vmem:[#allocation14 + $0x18] sm:$0xf]
    %v2650 = vld [vmem:[#allocation14 + $0x1c] sm:$0xf]
    %v2651 = vld [vmem:[#allocation14 + $0x20] sm:$0xf]
    %v2652 = vld [vmem:[#allocation14 + $0x24] sm:$0xf]
    %v2653 = vld [vmem:[#allocation14 + $0x28] sm:$0xf]
    %v2654 = vld [vmem:[#allocation14 + $0x2c] sm:$0xf]
    %v2655 = vld [vmem:[#allocation14 + $0x30] sm:$0xf]
    %v2656 = vld [vmem:[#allocation14 + $0x34] sm:$0xf]
    %v2657 = vld [vmem:[#allocation14 + $0x38] sm:$0xf]
    %v2658 = vld [vmem:[#allocation14 + $0x3c] sm:$0xf]
    %v2659 = vld [vmem:[#allocation14 + $0x40] sm:$0xf]
    %v2660 = vld [vmem:[#allocation14 + $0x44] sm:$0xf]
    %v2661 = vld [vmem:[#allocation14 + $0x48] sm:$0xf]
    %v2662 = vld [vmem:[#allocation14 + $0x4c] sm:$0xf]
    %v2663 = vld [vmem:[#allocation14 + $0x50] sm:$0xf]
    %v2664 = vld [vmem:[#allocation14 + $0x54] sm:$0xf]
    %v2665 = vld [vmem:[#allocation14 + $0x58] sm:$0xf]
    %v2666 = vld [vmem:[#allocation14 + $0x5c] sm:$0xf]
    %v2667 = vld [vmem:[#allocation14 + $0x60] sm:$0xf]
    %v2668 = vld [vmem:[#allocation14 + $0x64] sm:$0xf]
    %v2669 = vld [vmem:[#allocation14 + $0x68] sm:$0xf]
    %v2670 = vld [vmem:[#allocation14 + $0x6c] sm:$0xf]
    %v2671 = vld [vmem:[#allocation14 + $0x70] sm:$0xf]
    %v2672 = vld [vmem:[#allocation14 + $0x74] sm:$0xf]
    %v2673 = vld [vmem:[#allocation14 + $0x78] sm:$0xf]
    %v2674 = vld [vmem:[#allocation14 + $0x7c] sm:$0xf]
    %v2675 = vld [vmem:[%s18] sm:$0x1]
    %v2677 = vlaneseq
    %v2678 = vshrl.u32 %v2677, 7
    %v2679 = vsub.s32 0, %v2678
    %v2680 = vrot.slane %v2675, %v2679
    %v2714 = vunpack.c.l.b16 %v2643
    %v2715 = vunpack.c.l.b16 %v2644
    %v2716 = vunpack.c.l.b16 %v2645
    %v2717 = vunpack.c.l.b16 %v2646
    %v2718 = vunpack.c.l.b16 %v2647
    %v2719 = vunpack.c.l.b16 %v2648
    %v2720 = vunpack.c.l.b16 %v2649
    %v2721 = vunpack.c.l.b16 %v2650
    %v2722 = vunpack.c.l.b16 %v2651
    %v2723 = vunpack.c.l.b16 %v2652
    %v2724 = vunpack.c.l.b16 %v2653
    %v2725 = vunpack.c.l.b16 %v2654
    %v2726 = vunpack.c.l.b16 %v2655
    %v2727 = vunpack.c.l.b16 %v2656
    %v2728 = vunpack.c.l.b16 %v2657
    %v2729 = vunpack.c.l.b16 %v2658
    %v2730 = vunpack.c.l.b16 %v2659
    %v2731 = vunpack.c.l.b16 %v2660
    %v2732 = vunpack.c.l.b16 %v2661
    %v2733 = vunpack.c.l.b16 %v2662
    %v2734 = vunpack.c.l.b16 %v2663
    %v2735 = vunpack.c.l.b16 %v2664
    %v2736 = vunpack.c.l.b16 %v2665
    %v2737 = vunpack.c.l.b16 %v2666
    %v2738 = vunpack.c.l.b16 %v2667
    %v2739 = vunpack.c.l.b16 %v2668
    %v2740 = vunpack.c.l.b16 %v2669
    %v2741 = vunpack.c.l.b16 %v2670
    %v2742 = vunpack.c.l.b16 %v2671
    %v2743 = vunpack.c.l.b16 %v2672
    %v2744 = vunpack.c.l.b16 %v2673
    %v2745 = vunpack.c.l.b16 %v2674
    %v2746 = vpack.c.b16 %v2715, %v2714
    %v2747 = vpack.c.b16 %v2717, %v2716
    %v2748 = vpack.c.b16 %v2719, %v2718
    %v2749 = vpack.c.b16 %v2721, %v2720
    %v2750 = vpack.c.b16 %v2723, %v2722
    %v2751 = vpack.c.b16 %v2725, %v2724
    %v2752 = vpack.c.b16 %v2727, %v2726
    %v2753 = vpack.c.b16 %v2729, %v2728
    %v2754 = vpack.c.b16 %v2731, %v2730
    %v2755 = vpack.c.b16 %v2733, %v2732
    %v2756 = vpack.c.b16 %v2735, %v2734
    %v2757 = vpack.c.b16 %v2737, %v2736
    %v2758 = vpack.c.b16 %v2739, %v2738
    %v2759 = vpack.c.b16 %v2741, %v2740
    %v2760 = vpack.c.b16 %v2743, %v2742
    %v2761 = vpack.c.b16 %v2745, %v2744
    %2778 = vmatprep.subr.bf16.mxu0 0
    %2779 = vmatpush1.bf16.msra.mxu0 %v2746
    %2780 = vmatprep.subr.bf16.mxu0 0
    %2781 = vmatpush1.bf16.msra.mxu0 %v2747
    %2782 = vmatprep.subr.bf16.mxu0 0
    %2783 = vmatpush1.bf16.msra.mxu0 %v2748
    %2784 = vmatprep.subr.bf16.mxu0 0
    %2785 = vmatpush1.bf16.msra.mxu0 %v2749
    %2786 = vmatprep.subr.bf16.mxu0 0
    %2787 = vmatpush1.bf16.msra.mxu0 %v2750
    %2788 = vmatprep.subr.bf16.mxu0 0
    %2789 = vmatpush1.bf16.msra.mxu0 %v2751
    %2790 = vmatprep.subr.bf16.mxu0 0
    %2791 = vmatpush1.bf16.msra.mxu0 %v2752
    %2792 = vmatprep.subr.bf16.mxu0 0
    %2793 = vmatpush1.bf16.msra.mxu0 %v2753
    %2794 = vmatprep.subr.bf16.mxu0 0
    %2795 = vmatpush1.bf16.msra.mxu0 %v2754
    %2796 = vmatprep.subr.bf16.mxu0 0
    %2797 = vmatpush1.bf16.msra.mxu0 %v2755
    %2798 = vmatprep.subr.bf16.mxu0 0
    %2799 = vmatpush1.bf16.msra.mxu0 %v2756
    %2800 = vmatprep.subr.bf16.mxu0 0
    %2801 = vmatpush1.bf16.msra.mxu0 %v2757
    %2802 = vmatprep.subr.bf16.mxu0 0
    %2803 = vmatpush1.bf16.msra.mxu0 %v2758
    %2804 = vmatprep.subr.bf16.mxu0 0
    %2805 = vmatpush1.bf16.msra.mxu0 %v2759
    %2806 = vmatprep.subr.bf16.mxu0 0
    %2807 = vmatpush1.bf16.msra.mxu0 %v2760
    %2808 = vmatprep.subr.bf16.mxu0 0
    %2809 = vmatpush1.bf16.msra.mxu0 %v2761
    %2810 = vmatprep.mubr.bf16.mxu0 %v2642
    %2811 = vmatmul.mubr.bf16.gmra.mrb[0].mxu0 %v2641
    %v2812 = vpop.f32.mrb[0].mxu0
    %v2813 = vadd.f32 %v2680, %v2812
    %v2814 = vpop.f32.mrb[0].mxu0
    %v2815 = vpop.f32.mrb[0].mxu0
    %v2816 = vpop.f32.mrb[0].mxu0
    %2817 = vdwg.mxu0
    %vm2818 = vcmp.eq.s32.totalorder %v1481, 0
    %vm2819 = vcmp.eq.s32.totalorder %v1481, 1
    %vm2820 = vcmp.eq.s32.totalorder %v1481, 2
    %v2821 = vsel %vm2820, %v1501, 0.0
    %2823 = vset.pattern.permute.xlu0 0
    %2824 = vperm.xlu0 %2823, %v2813
    %v2825 = vpop.permute.xlu0 %2824
    %v2827 = vsel %vm2819, %v2825, %v2821
    %v2828 = vsel %vm2818, %v1510, %v2827
    %2829 = vst [vmem:[#allocation16] sm:$0xff] %v2828
    // Predicated region
    $region110: #{tpu_custom_call.1} parent=1 // pred_check
      _
    $region111: #{tpu_custom_call.1} parent=1 // pred_check_branch
      %2831 = sbr.rel (0) target = $region113
    $region112: #{tpu_custom_call.1} parent=1 // pred_region
      %s2833 = ssub.s32 128, 128
      %2834 = vsyncadd [#allocation4], %s2833
      %s2836 = sshll.u32 [#allocation16], 4
      %s2837 = int_to_ptr.vmem [resolvable:$true] %s2836
      %2839 = dma.vmem_to_hbm [thread:$0]  %s2837, 128, %s19, [#allocation4]
    $region113: #{tpu_custom_call.1} parent=1 // pred_fallthru
      _
    // Predicated region
    $region114: #{tpu_custom_call.1} parent=1 // pred_check
      _
    $region115: #{tpu_custom_call.1} parent=1 // pred_check_branch
      %2841 = sbr.rel (0) target = $region117
    $region116: #{tpu_custom_call.1} parent=1 // pred_region
      %2842 = dma.done [#allocation4], 128
    $region117: #{tpu_custom_call.1} parent=1 // pred_fallthru
      _
    %2843 = vsyncpa [#allocation3], 1
    %2844 = vsyncpa [#allocation6], 1
    %2845 = vsyncpa [#allocation9], 1
    %2846 = vsyncpa [#allocation12], 1
    %2847 = vsyncpa [#allocation15], 1
    %2848 = vsyncpa [#allocation4], 1

</llo_original>
